<compile_context>
chip_gen: v6e
topology: v6e:2x2x1
jax: 0.10.0
libtpu: 0.0.40
codegen_flags: <defaults>
</compile_context>

<pallas_src>
import functools

import jax
import jax.numpy as jnp
from jax.experimental import pallas as pl
from jax.experimental.pallas import tpu as pltpu


# ----------------------------------------------------------------------------
# Fused depthwise-separable conv kernel:
#   [optional pre-affine + LeakyReLU] -> depthwise 3x3 (folded BN) ->
#   pointwise 1x1 (+bias, optionally with a following BN folded in) ->
#   [optional LeakyReLU] -> [optional residual add] -> store.
# One batch element per grid step.
# ----------------------------------------------------------------------------
def _make_dsconv_kernel(*, stride, pad, pre_act, post_act, add_res,
                        H, W, Cin, Cout, Ho, Wo, neg_slope=0.01):

    def kernel(*refs):
        it = iter(refs)
        x_ref = next(it)                                  # (1, H, W, Cin)
        s_ref = next(it) if pre_act else None             # (1, Cin)
        t_ref = next(it) if pre_act else None             # (1, Cin)
        dww_ref = next(it)                                # (9, Cin)
        dwb_ref = next(it)                                # (1, Cin)
        pww_ref = next(it)                                # (Cin, Cout)
        pwb_ref = next(it)                                # (1, Cout)
        res_ref = next(it) if add_res else None           # (1, Ho, Wo, Cout)
        o_ref = next(it)                                  # (1, Ho, Wo, Cout)
        xp_scr = next(it)                                 # VMEM (H+2p, W+2p, Cin)

        # --- 1) optional per-channel affine + LeakyReLU, zero-padded into VMEM.
        interior = x_ref[0].astype(jnp.float32)           # (H, W, Cin)
        if pre_act:
            interior = interior * s_ref[0] + t_ref[0]
            interior = jnp.where(interior >= 0.0, interior, neg_slope * interior)
        if pad > 0:
            xp_scr[...] = jnp.zeros_like(xp_scr)
            xp_scr[pl.ds(pad, H), pl.ds(pad, W), :] = interior
        else:
            xp_scr[...] = interior

        # --- 2) depthwise 3x3 conv (BN folded into weights): 9 VPU taps.
        acc = jnp.zeros((Ho, Wo, Cin), jnp.float32)
        for dy in range(3):
            for dx in range(3):
                if stride == 1:
                    win = xp_scr[pl.ds(dy, Ho), pl.ds(dx, Wo), :]
                else:
                    win = xp_scr[pl.ds(dy, Ho, stride), pl.ds(dx, Wo, stride), :]
                acc = acc + win * dww_ref[dy * 3 + dx]
        acc = acc + dwb_ref[0]

        # --- 3) pointwise 1x1 conv on the MXU: (Ho*Wo, Cin) @ (Cin, Cout).
        z = jnp.dot(acc.reshape(Ho * Wo, Cin), pww_ref[...],
                    preferred_element_type=jnp.float32)
        z = z + pwb_ref[0]
        if post_act:
            z = jnp.where(z >= 0.0, z, neg_slope * z)
        z = z.reshape(Ho, Wo, Cout)
        if add_res:
            z = z + res_ref[0].astype(jnp.float32)

        o_ref[...] = z[None].astype(o_ref.dtype)

    return kernel


def _dsconv_pallas(x_nhwc, dw_w9, dw_b, pw_t, pw_b, *, stride, pad,
                   pre_scale=None, pre_shift=None, residual=None,
                   post_act=False, out_dtype=None):
    """Fused DS-conv stage.  x_nhwc: (N, H, W, Cin) -> (N, Ho, Wo, Cout)."""
    N, H, W, Cin = x_nhwc.shape
    Cout = pw_t.shape[1]
    Ho = (H + 2 * pad - 3) // stride + 1
    Wo = (W + 2 * pad - 3) // stride + 1
    pre_act = pre_scale is not None
    add_res = residual is not None
    out_dtype = out_dtype or x_nhwc.dtype

    kernel = _make_dsconv_kernel(stride=stride, pad=pad, pre_act=pre_act,
                                 post_act=post_act, add_res=add_res,
                                 H=H, W=W, Cin=Cin, Cout=Cout, Ho=Ho, Wo=Wo)

    args = [x_nhwc]
    in_specs = [pl.BlockSpec((1, H, W, Cin), lambda n: (n, 0, 0, 0))]
    if pre_act:
        args += [pre_scale.reshape(1, Cin).astype(jnp.float32),
                 pre_shift.reshape(1, Cin).astype(jnp.float32)]
        in_specs += [pl.BlockSpec((1, Cin), lambda n: (0, 0)),
                     pl.BlockSpec((1, Cin), lambda n: (0, 0))]
    args += [dw_w9.astype(jnp.float32),
             dw_b.reshape(1, Cin).astype(jnp.float32),
             pw_t.astype(jnp.float32),
             pw_b.reshape(1, Cout).astype(jnp.float32)]
    in_specs += [pl.BlockSpec((9, Cin), lambda n: (0, 0)),
                 pl.BlockSpec((1, Cin), lambda n: (0, 0)),
                 pl.BlockSpec((Cin, Cout), lambda n: (0, 0)),
                 pl.BlockSpec((1, Cout), lambda n: (0, 0))]
    if add_res:
        args.append(residual)
        in_specs.append(pl.BlockSpec((1, Ho, Wo, Cout), lambda n: (n, 0, 0, 0)))

    return pl.pallas_call(
        kernel,
        out_shape=jax.ShapeDtypeStruct((N, Ho, Wo, Cout), out_dtype),
        grid_spec=pltpu.PrefetchScalarGridSpec(
            num_scalar_prefetch=0,
            grid=(N,),
            in_specs=in_specs,
            out_specs=pl.BlockSpec((1, Ho, Wo, Cout), lambda n: (n, 0, 0, 0)),
            scratch_shapes=[pltpu.VMEM((H + 2 * pad, W + 2 * pad, Cin),
                                       jnp.float32)],
        ),
        compiler_params=pltpu.CompilerParams(
            dimension_semantics=("parallel",)),
    )(*args)


# ----------------------------------------------------------------------------
# BN folding helpers (plain-JAX glue, inference-mode BN).
# ----------------------------------------------------------------------------
def _bn_affine(bn, eps):
    g, b, mu, var = bn
    s = g * jax.lax.rsqrt(var + eps)
    return s, b - mu * s


def _fold_dsconv(ds, eps, post_scale=None, post_shift=None):
    """Fold the DSConv-internal BN (and optionally a following BN) into weights.

    Returns dw_w9 (9, Cin), dw_b (Cin,), pw_t (Cin, Cout), pw_b (Cout,).
    """
    s, t = _bn_affine(ds['bn'], eps)                       # BN between dw and pw
    dw_w = ds['dw_w'] * s[:, None, None]                   # (Cin, 3, 3)
    dw_b = ds['dw_b'] * s + t
    pw = ds['pw_w']                                        # (Cout, Cin)
    pw_b = ds['pw_b']
    if post_scale is not None:                             # BN after the pointwise
        pw = pw * post_scale[:, None]
        pw_b = pw_b * post_scale + post_shift
    dw_w9 = dw_w.reshape(dw_w.shape[0], 9).T               # (9, Cin)
    return dw_w9, dw_b, pw.T, pw_b


# ----------------------------------------------------------------------------
# Full module forward.
# ----------------------------------------------------------------------------
def residual_depthwise_conv(x, params, *, stride, padding, eps=1e-5):
    """x: (N, Cin, H, W) NCHW (like PyTorch).  Returns (N, Cout, Ho, Wo)."""
    x_nhwc = jnp.transpose(x, (0, 2, 3, 1))

    s0, t0 = _bn_affine(params['bn_in'], eps)
    s_mid, t_mid = _bn_affine(params['bn_mid'], eps)
    s_skip, t_skip = _bn_affine(params['bn_skip'], eps)

    dw1, db1, pw1, pb1 = _fold_dsconv(params['ds1'], eps, s_mid, t_mid)
    dw2, db2, pw2, pb2 = _fold_dsconv(params['ds2'], eps)
    dw3, db3, pw3, pb3 = _fold_dsconv(params['ds_skip'], eps, s_skip, t_skip)

    # conv_skip: DSConv(in->out, k3, stride, pad=1) followed by BN(out) (folded).
    skip = _dsconv_pallas(x_nhwc, dw3, db3, pw3, pb3, stride=stride, pad=1)

    # conv_block stage 1: BN(in)+LeakyReLU (pre-act) -> DSConv1 -> BN(out)+LeakyReLU.
    v = _dsconv_pallas(x_nhwc, dw1, db1, pw1, pb1, stride=stride, pad=padding,
                       pre_scale=s0, pre_shift=t0, post_act=True)

    # conv_block stage 2: DSConv2 (k3, stride=1, pad=1) + fused residual add.
    out_nhwc = _dsconv_pallas(v, dw2, db2, pw2, pb2, stride=1, pad=1,
                              residual=skip)

    return jnp.transpose(out_nhwc, (0, 3, 1, 2))


# ----------------------------------------------------------------------------
# Pure-JAX reference (mirrors the PyTorch module, inference-mode BN).
# ----------------------------------------------------------------------------
def _reference(x, params, stride, padding, eps=1e-5):
    def bn(y, p):
        g, b, mu, var = p
        inv = jax.lax.rsqrt(var + eps)
        return (y - mu[None, :, None, None]) * (g * inv)[None, :, None, None] \
            + b[None, :, None, None]

    def leaky(y):
        return jnp.where(y >= 0.0, y, 0.01 * y)

    def dsconv(y, ds, st, pd):
        C = y.shape[1]
        d = jax.lax.conv_general_dilated(
            y, ds['dw_w'][:, None, :, :], (st, st), [(pd, pd), (pd, pd)],
            dimension_numbers=('NCHW', 'OIHW', 'NCHW'), feature_group_count=C)
        d = d + ds['dw_b'][None, :, None, None]
        d = bn(d, ds['bn'])
        p = jax.lax.conv_general_dilated(
            d, ds['pw_w'][:, :, None, None], (1, 1), [(0, 0), (0, 0)],
            dimension_numbers=('NCHW', 'OIHW', 'NCHW'))
        return p + ds['pw_b'][None, :, None, None]

    xb = leaky(bn(x, params['bn_in']))
    v = leaky(bn(dsconv(xb, params['ds1'], stride, padding), params['bn_mid']))
    block = dsconv(v, params['ds2'], 1, 1)
    skip = bn(dsconv(x, params['ds_skip'], stride, 1), params['bn_skip'])
    return block + skip


# ----------------------------------------------------------------------------
# Deterministic synthetic parameters + self-test.
# ----------------------------------------------------------------------------
def _make_bn(key, c):
    k = jax.random.split(key, 4)
    return (jax.random.uniform(k[0], (c,), jnp.float32, minval=0.5, maxval=1.5),
            jax.random.normal(k[1], (c,), jnp.float32) * 0.1,
            jax.random.normal(k[2], (c,), jnp.float32) * 0.1,
            jax.random.uniform(k[3], (c,), jnp.float32, minval=0.5, maxval=1.5))


def _make_ds(key, cin, cout):
    k = jax.random.split(key, 5)
    return {'dw_w': jax.random.normal(k[0], (cin, 3, 3), jnp.float32) * 0.3,
            'dw_b': jax.random.normal(k[1], (cin,), jnp.float32) * 0.1,
            'bn': _make_bn(k[2], cin),
            'pw_w': jax.random.normal(k[3], (cout, cin), jnp.float32) * 0.3,
            'pw_b': jax.random.normal(k[4], (cout,), jnp.float32) * 0.1}


if __name__ == "__main__":
    key = jax.random.PRNGKey(0)
    N, Cin, Cout, H, W = 2, 4, 8, 16, 16
    stride, padding = 1, 1

    ks = jax.random.split(key, 8)
    x = jax.random.normal(ks[0], (N, Cin, H, W), jnp.float32)
    params = {
        'bn_in': _make_bn(ks[1], Cin),
        'ds1': _make_ds(ks[2], Cin, Cout),
        'bn_mid': _make_bn(ks[3], Cout),
        'ds2': _make_ds(ks[4], Cout, Cout),
        'ds_skip': _make_ds(ks[5], Cin, Cout),
        'bn_skip': _make_bn(ks[6], Cout),
    }

    out = residual_depthwise_conv(x, params, stride=stride, padding=padding)
    out = jax.block_until_ready(out)

    ref = _reference(x, params, stride, padding)
    assert out.shape == ref.shape, (out.shape, ref.shape)
    assert jnp.allclose(out, ref, atol=1e-4, rtol=1e-4), \
        float(jnp.max(jnp.abs(out - ref)))

    print("KERNEL_OK")
</pallas_src>

<mosaic_0001>
module attributes {stable_mosaic.version = 11 : i64} {
  func.func @kernel(%arg0: i32, %arg1: memref<1x16x16x4xf32, #tpu.memory_space<vmem>>, %arg2: memref<9x4xf32, #tpu.memory_space<vmem>>, %arg3: memref<1x4xf32, #tpu.memory_space<vmem>>, %arg4: memref<4x8xf32, #tpu.memory_space<vmem>>, %arg5: memref<1x8xf32, #tpu.memory_space<vmem>>, %arg6: memref<1x16x16x8xf32, #tpu.memory_space<vmem>>, %arg7: memref<18x18x4xf32, #tpu.memory_space<vmem>>) attributes {dimension_semantics = [#tpu.dimension_semantics<parallel>], iteration_bounds = array<i64: 2>, scalar_prefetch = 0 : i64, scratch_operands = 1 : i64, tpu.core_type = #tpu.core_type<tc>, window_params = [{transform_indices = @transform_0, window_bounds = array<i64: 1, 16, 16, 4>}, {pipeline_mode = #tpu.pipeline_mode<synchronous>, transform_indices = @transform_1, window_bounds = array<i64: 9, 4>}, {pipeline_mode = #tpu.pipeline_mode<synchronous>, transform_indices = @transform_2, window_bounds = array<i64: 1, 4>}, {pipeline_mode = #tpu.pipeline_mode<synchronous>, transform_indices = @transform_3, window_bounds = array<i64: 4, 8>}, {pipeline_mode = #tpu.pipeline_mode<synchronous>, transform_indices = @transform_4, window_bounds = array<i64: 1, 8>}, {transform_indices = @transform_5, window_bounds = array<i64: 1, 16, 16, 8>}]} {
    %c0 = arith.constant 0 : index
    %c0_0 = arith.constant 0 : index
    %c0_1 = arith.constant 0 : index
    %c0_2 = arith.constant 0 : index
    %0 = vector.load %arg1[%c0, %c0_0, %c0_1, %c0_2] : memref<1x16x16x4xf32, #tpu.memory_space<vmem>>, vector<1x16x16x4xf32>
    %1 = vector.shape_cast %0 : vector<1x16x16x4xf32> to vector<16x16x4xf32>
    %cst = arith.constant 0.000000e+00 : f32
    %2 = vector.broadcast %cst : f32 to vector<18x18x4xf32>
    %c0_3 = arith.constant 0 : index
    %c0_4 = arith.constant 0 : index
    %c0_5 = arith.constant 0 : index
    %3 = vector.load %arg7[%c0_3, %c0_4, %c0_5] : memref<18x18x4xf32, #tpu.memory_space<vmem>>, vector<18x18x4xf32>
    tpu.vector_store %arg7[%c0_3, %c0_4, %c0_5], %2 {strides = array<i32>} : memref<18x18x4xf32, #tpu.memory_space<vmem>>, vector<18x18x4xf32>,
    %c1 = arith.constant 1 : index
    %c1_6 = arith.constant 1 : index
    %c0_7 = arith.constant 0 : index
    %4 = vector.load %arg7[%c1, %c1_6, %c0_7] : memref<18x18x4xf32, #tpu.memory_space<vmem>>, vector<16x16x4xf32>
    tpu.vector_store %arg7[%c1, %c1_6, %c0_7], %1 {strides = array<i32>} : memref<18x18x4xf32, #tpu.memory_space<vmem>>, vector<16x16x4xf32>,
    %cst_8 = arith.constant 0.000000e+00 : f32
    %5 = vector.broadcast %cst_8 : f32 to vector<16x16x4xf32>
    %c0_9 = arith.constant 0 : index
    %c0_10 = arith.constant 0 : index
    %c0_11 = arith.constant 0 : index
    %6 = vector.load %arg7[%c0_9, %c0_10, %c0_11] : memref<18x18x4xf32, #tpu.memory_space<vmem>>, vector<16x16x4xf32>
    %c0_12 = arith.constant 0 : index
    %c0_13 = arith.constant 0 : index
    %7 = vector.load %arg2[%c0_12, %c0_13] : memref<9x4xf32, #tpu.memory_space<vmem>>, vector<1x4xf32>
    %8 = vector.shape_cast %7 : vector<1x4xf32> to vector<4xf32>
    %9 = vector.shape_cast %8 : vector<4xf32> to vector<1x1x4xf32>
    %10 = vector.broadcast %9 : vector<1x1x4xf32> to vector<16x16x4xf32>
    %11 = arith.mulf %6, %10 : vector<16x16x4xf32>
    %12 = arith.addf %5, %11 : vector<16x16x4xf32>
    %c0_14 = arith.constant 0 : index
    %c1_15 = arith.constant 1 : index
    %c0_16 = arith.constant 0 : index
    %13 = vector.load %arg7[%c0_14, %c1_15, %c0_16] : memref<18x18x4xf32, #tpu.memory_space<vmem>>, vector<16x16x4xf32>
    %c1_17 = arith.constant 1 : index
    %c0_18 = arith.constant 0 : index
    %14 = vector.load %arg2[%c1_17, %c0_18] : memref<9x4xf32, #tpu.memory_space<vmem>>, vector<1x4xf32>
    %15 = vector.shape_cast %14 : vector<1x4xf32> to vector<4xf32>
    %16 = vector.shape_cast %15 : vector<4xf32> to vector<1x1x4xf32>
    %17 = vector.broadcast %16 : vector<1x1x4xf32> to vector<16x16x4xf32>
    %18 = arith.mulf %13, %17 : vector<16x16x4xf32>
    %19 = arith.addf %12, %18 : vector<16x16x4xf32>
    %c0_19 = arith.constant 0 : index
    %c2 = arith.constant 2 : index
    %c0_20 = arith.constant 0 : index
    %20 = vector.load %arg7[%c0_19, %c2, %c0_20] : memref<18x18x4xf32, #tpu.memory_space<vmem>>, vector<16x16x4xf32>
    %c2_21 = arith.constant 2 : index
    %c0_22 = arith.constant 0 : index
    %21 = vector.load %arg2[%c2_21, %c0_22] : memref<9x4xf32, #tpu.memory_space<vmem>>, vector<1x4xf32>
    %22 = vector.shape_cast %21 : vector<1x4xf32> to vector<4xf32>
    %23 = vector.shape_cast %22 : vector<4xf32> to vector<1x1x4xf32>
    %24 = vector.broadcast %23 : vector<1x1x4xf32> to vector<16x16x4xf32>
    %25 = arith.mulf %20, %24 : vector<16x16x4xf32>
    %26 = arith.addf %19, %25 : vector<16x16x4xf32>
    %c1_23 = arith.constant 1 : index
    %c0_24 = arith.constant 0 : index
    %c0_25 = arith.constant 0 : index
    %27 = vector.load %arg7[%c1_23, %c0_24, %c0_25] : memref<18x18x4xf32, #tpu.memory_space<vmem>>, vector<16x16x4xf32>
    %c3 = arith.constant 3 : index
    %c0_26 = arith.constant 0 : index
    %28 = vector.load %arg2[%c3, %c0_26] : memref<9x4xf32, #tpu.memory_space<vmem>>, vector<1x4xf32>
    %29 = vector.shape_cast %28 : vector<1x4xf32> to vector<4xf32>
    %30 = vector.shape_cast %29 : vector<4xf32> to vector<1x1x4xf32>
    %31 = vector.broadcast %30 : vector<1x1x4xf32> to vector<16x16x4xf32>
    %32 = arith.mulf %27, %31 : vector<16x16x4xf32>
    %33 = arith.addf %26, %32 : vector<16x16x4xf32>
    %c1_27 = arith.constant 1 : index
    %c1_28 = arith.constant 1 : index
    %c0_29 = arith.constant 0 : index
    %34 = vector.load %arg7[%c1_27, %c1_28, %c0_29] : memref<18x18x4xf32, #tpu.memory_space<vmem>>, vector<16x16x4xf32>
    %c4 = arith.constant 4 : index
    %c0_30 = arith.constant 0 : index
    %35 = vector.load %arg2[%c4, %c0_30] : memref<9x4xf32, #tpu.memory_space<vmem>>, vector<1x4xf32>
    %36 = vector.shape_cast %35 : vector<1x4xf32> to vector<4xf32>
    %37 = vector.shape_cast %36 : vector<4xf32> to vector<1x1x4xf32>
    %38 = vector.broadcast %37 : vector<1x1x4xf32> to vector<16x16x4xf32>
    %39 = arith.mulf %34, %38 : vector<16x16x4xf32>
    %40 = arith.addf %33, %39 : vector<16x16x4xf32>
    %c1_31 = arith.constant 1 : index
    %c2_32 = arith.constant 2 : index
    %c0_33 = arith.constant 0 : index
    %41 = vector.load %arg7[%c1_31, %c2_32, %c0_33] : memref<18x18x4xf32, #tpu.memory_space<vmem>>, vector<16x16x4xf32>
    %c5 = arith.constant 5 : index
    %c0_34 = arith.constant 0 : index
    %42 = vector.load %arg2[%c5, %c0_34] : memref<9x4xf32, #tpu.memory_space<vmem>>, vector<1x4xf32>
    %43 = vector.shape_cast %42 : vector<1x4xf32> to vector<4xf32>
    %44 = vector.shape_cast %43 : vector<4xf32> to vector<1x1x4xf32>
    %45 = vector.broadcast %44 : vector<1x1x4xf32> to vector<16x16x4xf32>
    %46 = arith.mulf %41, %45 : vector<16x16x4xf32>
    %47 = arith.addf %40, %46 : vector<16x16x4xf32>
    %c2_35 = arith.constant 2 : index
    %c0_36 = arith.constant 0 : index
    %c0_37 = arith.constant 0 : index
    %48 = vector.load %arg7[%c2_35, %c0_36, %c0_37] : memref<18x18x4xf32, #tpu.memory_space<vmem>>, vector<16x16x4xf32>
    %c6 = arith.constant 6 : index
    %c0_38 = arith.constant 0 : index
    %49 = vector.load %arg2[%c6, %c0_38] : memref<9x4xf32, #tpu.memory_space<vmem>>, vector<1x4xf32>
    %50 = vector.shape_cast %49 : vector<1x4xf32> to vector<4xf32>
    %51 = vector.shape_cast %50 : vector<4xf32> to vector<1x1x4xf32>
    %52 = vector.broadcast %51 : vector<1x1x4xf32> to vector<16x16x4xf32>
    %53 = arith.mulf %48, %52 : vector<16x16x4xf32>
    %54 = arith.addf %47, %53 : vector<16x16x4xf32>
    %c2_39 = arith.constant 2 : index
    %c1_40 = arith.constant 1 : index
    %c0_41 = arith.constant 0 : index
    %55 = vector.load %arg7[%c2_39, %c1_40, %c0_41] : memref<18x18x4xf32, #tpu.memory_space<vmem>>, vector<16x16x4xf32>
    %c7 = arith.constant 7 : index
    %c0_42 = arith.constant 0 : index
    %56 = vector.load %arg2[%c7, %c0_42] : memref<9x4xf32, #tpu.memory_space<vmem>>, vector<1x4xf32>
    %57 = vector.shape_cast %56 : vector<1x4xf32> to vector<4xf32>
    %58 = vector.shape_cast %57 : vector<4xf32> to vector<1x1x4xf32>
    %59 = vector.broadcast %58 : vector<1x1x4xf32> to vector<16x16x4xf32>
    %60 = arith.mulf %55, %59 : vector<16x16x4xf32>
    %61 = arith.addf %54, %60 : vector<16x16x4xf32>
    %c2_43 = arith.constant 2 : index
    %c2_44 = arith.constant 2 : index
    %c0_45 = arith.constant 0 : index
    %62 = vector.load %arg7[%c2_43, %c2_44, %c0_45] : memref<18x18x4xf32, #tpu.memory_space<vmem>>, vector<16x16x4xf32>
    %c8 = arith.constant 8 : index
    %c0_46 = arith.constant 0 : index
    %63 = vector.load %arg2[%c8, %c0_46] : memref<9x4xf32, #tpu.memory_space<vmem>>, vector<1x4xf32>
    %64 = vector.shape_cast %63 : vector<1x4xf32> to vector<4xf32>
    %65 = vector.shape_cast %64 : vector<4xf32> to vector<1x1x4xf32>
    %66 = vector.broadcast %65 : vector<1x1x4xf32> to vector<16x16x4xf32>
    %67 = arith.mulf %62, %66 : vector<16x16x4xf32>
    %68 = arith.addf %61, %67 : vector<16x16x4xf32>
    %c0_47 = arith.constant 0 : index
    %c0_48 = arith.constant 0 : index
    %69 = vector.load %arg3[%c0_47, %c0_48] : memref<1x4xf32, #tpu.memory_space<vmem>>, vector<1x4xf32>
    %70 = vector.shape_cast %69 : vector<1x4xf32> to vector<4xf32>
    %71 = vector.shape_cast %70 : vector<4xf32> to vector<1x1x4xf32>
    %72 = vector.broadcast %71 : vector<1x1x4xf32> to vector<16x16x4xf32>
    %73 = arith.addf %68, %72 : vector<16x16x4xf32>
    %74 = vector.shape_cast %73 : vector<16x16x4xf32> to vector<256x4xf32>
    %c0_49 = arith.constant 0 : index
    %c0_50 = arith.constant 0 : index
    %75 = vector.load %arg4[%c0_49, %c0_50] : memref<4x8xf32, #tpu.memory_space<vmem>>, vector<4x8xf32>
    %cst_51 = arith.constant dense<0.000000e+00> : vector<256x8xf32>
    %76 = tpu.matmul %74, %75, %cst_51 {dimension_numbers = #tpu.dot_dimension_numbers<[1], [0], [0], [1], [0, 0, 1, 1], [], []>} : vector<256x4xf32>, vector<4x8xf32>, vector<256x8xf32> -> vector<256x8xf32>
    %c0_52 = arith.constant 0 : index
    %c0_53 = arith.constant 0 : index
    %77 = vector.load %arg5[%c0_52, %c0_53] : memref<1x8xf32, #tpu.memory_space<vmem>>, vector<1x8xf32>
    %78 = vector.shape_cast %77 : vector<1x8xf32> to vector<8xf32>
    %79 = vector.shape_cast %78 : vector<8xf32> to vector<1x8xf32>
    %80 = vector.broadcast %79 : vector<1x8xf32> to vector<256x8xf32>
    %81 = arith.addf %76, %80 : vector<256x8xf32>
    %82 = vector.shape_cast %81 : vector<256x8xf32> to vector<16x16x8xf32>
    %83 = vector.shape_cast %82 : vector<16x16x8xf32> to vector<1x16x16x8xf32>
    %c0_54 = arith.constant 0 : index
    %c0_55 = arith.constant 0 : index
    %c0_56 = arith.constant 0 : index
    %c0_57 = arith.constant 0 : index
    %84 = vector.load %arg6[%c0_54, %c0_55, %c0_56, %c0_57] : memref<1x16x16x8xf32, #tpu.memory_space<vmem>>, vector<1x16x16x8xf32>
    tpu.vector_store %arg6[%c0_54, %c0_55, %c0_56, %c0_57], %83 {strides = array<i32>} : memref<1x16x16x8xf32, #tpu.memory_space<vmem>>, vector<1x16x16x8xf32>,
    return
  }
  func.func @transform_0(%arg0: i32) -> (i32, i32, i32, i32) {
    %c0_i32 = arith.constant 0 : i32
    %c0_i32_0 = arith.constant 0 : i32
    %c0_i32_1 = arith.constant 0 : i32
    %c0_i32_2 = arith.constant 0 : i32
    return %arg0, %c0_i32, %c0_i32_0, %c0_i32_1 : i32, i32, i32, i32
  }
  func.func @transform_1(%arg0: i32) -> (i32, i32) {
    %c0_i32 = arith.constant 0 : i32
    %c0_i32_0 = arith.constant 0 : i32
    %c0_i32_1 = arith.constant 0 : i32
    return %c0_i32, %c0_i32_0 : i32, i32
  }
  func.func @transform_2(%arg0: i32) -> (i32, i32) {
    %c0_i32 = arith.constant 0 : i32
    %c0_i32_0 = arith.constant 0 : i32
    %c0_i32_1 = arith.constant 0 : i32
    return %c0_i32, %c0_i32_0 : i32, i32
  }
  func.func @transform_3(%arg0: i32) -> (i32, i32) {
    %c0_i32 = arith.constant 0 : i32
    %c0_i32_0 = arith.constant 0 : i32
    %c0_i32_1 = arith.constant 0 : i32
    return %c0_i32, %c0_i32_0 : i32, i32
  }
  func.func @transform_4(%arg0: i32) -> (i32, i32) {
    %c0_i32 = arith.constant 0 : i32
    %c0_i32_0 = arith.constant 0 : i32
    %c0_i32_1 = arith.constant 0 : i32
    return %c0_i32, %c0_i32_0 : i32, i32
  }
  func.func @transform_5(%arg0: i32) -> (i32, i32, i32, i32) {
    %c0_i32 = arith.constant 0 : i32
    %c0_i32_0 = arith.constant 0 : i32
    %c0_i32_1 = arith.constant 0 : i32
    %c0_i32_2 = arith.constant 0 : i32
    return %arg0, %c0_i32, %c0_i32_0, %c0_i32_1 : i32, i32, i32, i32
  }
}

</mosaic_0001>

<llo_original>
// kernel: tpu_custom_call.1
$region0: #{tpu_custom_call.1}
  #allocation0 [shape = 'u32[]', space=smem, size = 0x4, offset = 0x4, fixed_abs, tag = 'smem constant byte address 0x4 - core index']
  #allocation1 [shape = 'u32[144,128]{1,0:T(1,128)}', space=vmem, size = 0x12000, scoped, tag = 'internal scratch']
  #allocation2 [shape = 'f32[18,18,4]{2,1,0:T(8,128)}', space=vmem, size = 0x36000, scoped, tag = 'scratch operand']
  %s0 = inlined_call_operand.vmem [shape: f32[2,16,16,4], index: 0, kind: input, shape index: {}]
  %s1 = inlined_call_operand.vmem [shape: f32[9,4], index: 1, kind: input, shape index: {}]
  %s2 = inlined_call_operand.vmem [shape: f32[1,4], index: 2, kind: input, shape index: {}]
  %s3 = inlined_call_operand.vmem [shape: f32[4,8], index: 3, kind: input, shape index: {}]
  %s4 = inlined_call_operand.vmem [shape: f32[1,8], index: 4, kind: input, shape index: {}]
  %s5 = inlined_call_operand.vmem [shape: f32[2,16,16,8], index: 5, kind: output, shape index: {}]
  %s6 = sld [smem:[#allocation0]]
  $region53: #{tpu_custom_call.1} parent=0
    _
  %s8 = ssub.s32 1, %s6
  %s9 = scalar_select 0, %s8, %s6
  loop: start=0, step=1, limit=4
  $region2: #{tpu_custom_call.1} parent=0 // loop_pre_header
    _
  $region3: #{tpu_custom_call.1} parent=0 // loop_header
    %s11 = sphi 0, %s15
    %p12 = scmp.ge.s32.totalorder %s11, 4
    %s21 = sphi 0, %s23
    %s24 = sphi 0, %s21
    %s25 = sphi 0, %s24
    %s41 = sphi 0, %s25
    %s45 = sphi 0, %s45
    %s47 = sphi 0, %s45
    %s48 = sphi 0, %s47
    %s62 = sphi 0, %s48
    %s66 = sphi 0, %s66
    %s68 = sphi 0, %s66
    %s69 = sphi 0, %s68
    %s83 = sphi 0, %s69
    %s87 = sphi 0, %s87
    %s89 = sphi 0, %s87
    %s90 = sphi 0, %s89
    %s104 = sphi 0, %s90
    %s108 = sphi 0, %s108
    %s110 = sphi 0, %s108
    %s111 = sphi 0, %s110
    %s125 = sphi 0, %s111
    %s131 = sphi 0, %s133
    %s134 = sphi 0, %s131
    %s135 = sphi 0, %s134
    %s151 = sphi 0, %s135
  $region4: #{tpu_custom_call.1} parent=0 // loop_header_branch
    %14 = sbr.rel (%p12) target = $region8
  $region5: #{tpu_custom_call.1} parent=0 // loop_body
    %s16 = ssub.s32 %s11, 1
    %s17 = ssub.s32 %s11, 2
    %s18 = sadd.s32 %s11, 1
    %s19 = ssub.s32 %s11, %s18
    %p20 = scmp.eq.s32.totalorder %s19, 0
    %s22 = sadd.s32 %s21, 1
    %s23 = scalar_select %p20, %s21, %s22
    %p26 = pneg %p20
    %p27 = scmp.eq.s32.totalorder %s11, 1
    %p28 = por %p26, %p27
    %p29 = scmp.ne.s32.totalorder %s21, %s24
    %p30 = scmp.eq.s32.totalorder %s11, 0
    %p31 = por %p29, %p30
    %p32 = scmp.ne.s32.totalorder %s21, %s24
    %p33 = scmp.eq.s32.totalorder %s16, 1
    %p34 = por %p32, %p33
    %p35 = scmp.ne.s32.totalorder %s24, %s25
    %p36 = scmp.eq.s32.totalorder %s16, 0
    %p37 = por %p35, %p36
    %p38 = scmp.ne.s32.totalorder %s24, %s25
    %p39 = scmp.eq.s32.totalorder %s17, 1
    %p40 = por %p38, %p39
    %p42 = scmp.ne.s32.totalorder %s25, %s41
    %p43 = scmp.eq.s32.totalorder %s17, 0
    %p44 = por %p42, %p43
    %s46 = sadd.s32 %s45, 1
    %p49 = scmp.eq.s32.totalorder %s11, 1
    %p50 = scmp.ne.s32.totalorder %s45, %s47
    %p51 = scmp.eq.s32.totalorder %s11, 0
    %p52 = por %p50, %p51
    %p53 = scmp.ne.s32.totalorder %s45, %s47
    %p54 = scmp.eq.s32.totalorder %s16, 1
    %p55 = por %p53, %p54
    %p56 = scmp.ne.s32.totalorder %s47, %s48
    %p57 = scmp.eq.s32.totalorder %s16, 0
    %p58 = por %p56, %p57
    %p59 = scmp.ne.s32.totalorder %s47, %s48
    %p60 = scmp.eq.s32.totalorder %s17, 1
    %p61 = por %p59, %p60
    %p63 = scmp.ne.s32.totalorder %s48, %s62
    %p64 = scmp.eq.s32.totalorder %s17, 0
    %p65 = por %p63, %p64
    %s67 = sadd.s32 %s66, 1
    %p70 = scmp.eq.s32.totalorder %s11, 1
    %p71 = scmp.ne.s32.totalorder %s66, %s68
    %p72 = scmp.eq.s32.totalorder %s11, 0
    %p73 = por %p71, %p72
    %p74 = scmp.ne.s32.totalorder %s66, %s68
    %p75 = scmp.eq.s32.totalorder %s16, 1
    %p76 = por %p74, %p75
    %p77 = scmp.ne.s32.totalorder %s68, %s69
    %p78 = scmp.eq.s32.totalorder %s16, 0
    %p79 = por %p77, %p78
    %p80 = scmp.ne.s32.totalorder %s68, %s69
    %p81 = scmp.eq.s32.totalorder %s17, 1
    %p82 = por %p80, %p81
    %p84 = scmp.ne.s32.totalorder %s69, %s83
    %p85 = scmp.eq.s32.totalorder %s17, 0
    %p86 = por %p84, %p85
    %s88 = sadd.s32 %s87, 1
    %p91 = scmp.eq.s32.totalorder %s11, 1
    %p92 = scmp.ne.s32.totalorder %s87, %s89
    %p93 = scmp.eq.s32.totalorder %s11, 0
    %p94 = por %p92, %p93
    %p95 = scmp.ne.s32.totalorder %s87, %s89
    %p96 = scmp.eq.s32.totalorder %s16, 1
    %p97 = por %p95, %p96
    %p98 = scmp.ne.s32.totalorder %s89, %s90
    %p99 = scmp.eq.s32.totalorder %s16, 0
    %p100 = por %p98, %p99
    %p101 = scmp.ne.s32.totalorder %s89, %s90
    %p102 = scmp.eq.s32.totalorder %s17, 1
    %p103 = por %p101, %p102
    %p105 = scmp.ne.s32.totalorder %s90, %s104
    %p106 = scmp.eq.s32.totalorder %s17, 0
    %p107 = por %p105, %p106
    %s109 = sadd.s32 %s108, 1
    %p112 = scmp.eq.s32.totalorder %s11, 1
    %p113 = scmp.ne.s32.totalorder %s108, %s110
    %p114 = scmp.eq.s32.totalorder %s11, 0
    %p115 = por %p113, %p114
    %p116 = scmp.ne.s32.totalorder %s108, %s110
    %p117 = scmp.eq.s32.totalorder %s16, 1
    %p118 = por %p116, %p117
    %p119 = scmp.ne.s32.totalorder %s110, %s111
    %p120 = scmp.eq.s32.totalorder %s16, 0
    %p121 = por %p119, %p120
    %p122 = scmp.ne.s32.totalorder %s110, %s111
    %p123 = scmp.eq.s32.totalorder %s17, 1
    %p124 = por %p122, %p123
    %p126 = scmp.ne.s32.totalorder %s111, %s125
    %p127 = scmp.eq.s32.totalorder %s17, 0
    %p128 = por %p126, %p127
    %s129 = ssub.s32 %s11, %s18
    %p130 = scmp.eq.s32.totalorder %s129, 0
    %s132 = sadd.s32 %s131, 1
    %s133 = scalar_select %p130, %s131, %s132
    %p136 = pneg %p130
    %p137 = scmp.eq.s32.totalorder %s11, 1
    %p138 = por %p136, %p137
    %p139 = scmp.ne.s32.totalorder %s131, %s134
    %p140 = scmp.eq.s32.totalorder %s11, 0
    %p141 = por %p139, %p140
    %p142 = scmp.ne.s32.totalorder %s131, %s134
    %p143 = scmp.eq.s32.totalorder %s16, 1
    %p144 = por %p142, %p143
    %p145 = scmp.ne.s32.totalorder %s134, %s135
    %p146 = scmp.eq.s32.totalorder %s16, 0
    %p147 = por %p145, %p146
    %p148 = scmp.ne.s32.totalorder %s134, %s135
    %p149 = scmp.eq.s32.totalorder %s17, 1
    %p150 = por %p148, %p149
    %p152 = scmp.ne.s32.totalorder %s135, %s151
    %p153 = scmp.eq.s32.totalorder %s17, 0
    %p154 = por %p152, %p153
    %p155 = scmp.le.s32.totalorder 1, %s11
    %p156 = scmp.lt.s32.totalorder %s11, 3
    %p157 = pnand %p155, %p156
    %p158 = pneg %p157
    // Predicated region
    $region9: #{tpu_custom_call.1} parent=5 // pred_check
      _
    $region10: #{tpu_custom_call.1} parent=5 // pred_check_branch
      %160 = sbr.rel (%p157) target = $region12
    $region11: #{tpu_custom_call.1} parent=5 // pred_region
      %s161 = ssub.s32 %s11, 1
      // Predicated region
      $region13: #{tpu_custom_call.1} parent=11 // pred_check
        %p162 = pneg %p58
      $region14: #{tpu_custom_call.1} parent=11 // pred_check_branch
        %164 = sbr.rel (%p162) target = $region16
      $region15: #{tpu_custom_call.1} parent=11 // pred_region
        _
      $region16: #{tpu_custom_call.1} parent=11 // pred_fallthru
        _
      // Predicated region
      $region17: #{tpu_custom_call.1} parent=11 // pred_check
        %p165 = pneg %p79
      $region18: #{tpu_custom_call.1} parent=11 // pred_check_branch
        %167 = sbr.rel (%p165) target = $region20
      $region19: #{tpu_custom_call.1} parent=11 // pred_region
        _
      $region20: #{tpu_custom_call.1} parent=11 // pred_fallthru
        _
      // Predicated region
      $region21: #{tpu_custom_call.1} parent=11 // pred_check
        %p168 = pneg %p100
      $region22: #{tpu_custom_call.1} parent=11 // pred_check_branch
        %170 = sbr.rel (%p168) target = $region24
      $region23: #{tpu_custom_call.1} parent=11 // pred_region
        _
      $region24: #{tpu_custom_call.1} parent=11 // pred_fallthru
        _
      // Predicated region
      $region25: #{tpu_custom_call.1} parent=11 // pred_check
        %p171 = pneg %p121
      $region26: #{tpu_custom_call.1} parent=11 // pred_check_branch
        %173 = sbr.rel (%p171) target = $region28
      $region27: #{tpu_custom_call.1} parent=11 // pred_region
        _
      $region28: #{tpu_custom_call.1} parent=11 // pred_fallthru
        _
    $region12: #{tpu_custom_call.1} parent=5 // pred_fallthru
      _
    %p174 = scmp.lt.s32.totalorder %s11, 2
    // Predicated region
    $region29: #{tpu_custom_call.1} parent=5 // pred_check
      %p175 = pneg %p174
    $region30: #{tpu_custom_call.1} parent=5 // pred_check_branch
      %177 = sbr.rel (%p175) target = $region32
    $region31: #{tpu_custom_call.1} parent=5 // pred_region
      // Predicated region
      $region33: #{tpu_custom_call.1} parent=31 // pred_check
        %p178 = pneg %p31
      $region34: #{tpu_custom_call.1} parent=31 // pred_check_branch
        %180 = sbr.rel (%p178) target = $region36
      $region35: #{tpu_custom_call.1} parent=31 // pred_region
        %p181 = scmp.lt.s32.totalorder %s11, 1
        %s182 = scalar_select %p181, %s11, 1
        %s183 = smul.addr %s182, 32
        %s184 = smul.addr %s183, 8
        %s185 = scalar_lea.vmem %s0, %s184
      $region36: #{tpu_custom_call.1} parent=31 // pred_fallthru
        _
    $region32: #{tpu_custom_call.1} parent=5 // pred_fallthru
      _
    %p186 = scmp.le.s32.totalorder 1, %s11
    %p187 = scmp.lt.s32.totalorder %s11, 3
    %p188 = pnand %p186, %p187
    %p189 = pneg %p188
    // Predicated region
    $region37: #{tpu_custom_call.1} parent=5 // pred_check
      _
    $region38: #{tpu_custom_call.1} parent=5 // pred_check_branch
      %191 = sbr.rel (%p188) target = $region40
    $region39: #{tpu_custom_call.1} parent=5 // pred_region
      %s192 = ssub.s32 %s11, 1
      %p193 = scmp.lt.s32.totalorder %s16, 1
      %s194 = scalar_select %p193, %s16, 1
      %s195 = smul.addr %s194, 32
      %s196 = smul.addr %s195, 8
      %s197 = scalar_lea.vmem %s0, %s196
      %p198 = pneg %p37
      %p199 = pneg %p34
      %p200 = pneg %p58
      %p201 = pneg %p55
      %p202 = pneg %p79
      %p203 = pneg %p76
      %p204 = pneg %p100
      %p205 = pneg %p97
      %p206 = pneg %p121
      %p207 = pneg %p118
      %p208 = pneg %p147
      %p209 = pneg %p144
      %p210 = scmp.lt.s32.totalorder %s16, 1
      %s211 = scalar_select %p210, %s16, 1
      %s212 = smul.addr %s211, 32
      %s213 = smul.addr %s212, 8
      %s214 = scalar_lea.vmem %s5, %s213
      %p215 = scmp.lt.s32.totalorder %s16, 1
      %s216 = scalar_select %p215, %s16, 1
      %s217 = smul.addr %s216, 32
      %s218 = smul.addr %s217, 8
      %s219 = scalar_lea.vmem %s0, %s218
      %p220 = scmp.lt.s32.totalorder %s16, 1
      %s221 = scalar_select %p220, %s16, 1
      %s222 = smul.addr %s221, 32
      %s223 = smul.addr %s222, 8
      %s224 = scalar_lea.vmem %s5, %s223
      %v225 = vld [vmem:[%s219] sm:$0xff]
      %v226 = vld [vmem:[%s219 + $0x8] sm:$0xff]
      %v227 = vld [vmem:[%s219 + $0x10] sm:$0xff]
      %v228 = vld [vmem:[%s219 + $0x18] sm:$0xff]
      %v229 = vld [vmem:[%s219 + $0x20] sm:$0xff]
      %v230 = vld [vmem:[%s219 + $0x28] sm:$0xff]
      %v231 = vld [vmem:[%s219 + $0x30] sm:$0xff]
      %v232 = vld [vmem:[%s219 + $0x38] sm:$0xff]
      %v233 = vld [vmem:[%s219 + $0x40] sm:$0xff]
      %v234 = vld [vmem:[%s219 + $0x48] sm:$0xff]
      %v235 = vld [vmem:[%s219 + $0x50] sm:$0xff]
      %v236 = vld [vmem:[%s219 + $0x58] sm:$0xff]
      %v237 = vld [vmem:[%s219 + $0x60] sm:$0xff]
      %v238 = vld [vmem:[%s219 + $0x68] sm:$0xff]
      %v239 = vld [vmem:[%s219 + $0x70] sm:$0xff]
      %v240 = vld [vmem:[%s219 + $0x78] sm:$0xff]
      %v241 = vld [vmem:[%s219 + $0x80] sm:$0xff]
      %v242 = vld [vmem:[%s219 + $0x88] sm:$0xff]
      %v243 = vld [vmem:[%s219 + $0x90] sm:$0xff]
      %v244 = vld [vmem:[%s219 + $0x98] sm:$0xff]
      %v245 = vld [vmem:[%s219 + $0xa0] sm:$0xff]
      %v246 = vld [vmem:[%s219 + $0xa8] sm:$0xff]
      %v247 = vld [vmem:[%s219 + $0xb0] sm:$0xff]
      %v248 = vld [vmem:[%s219 + $0xb8] sm:$0xff]
      %v249 = vld [vmem:[%s219 + $0xc0] sm:$0xff]
      %v250 = vld [vmem:[%s219 + $0xc8] sm:$0xff]
      %v251 = vld [vmem:[%s219 + $0xd0] sm:$0xff]
      %v252 = vld [vmem:[%s219 + $0xd8] sm:$0xff]
      %v253 = vld [vmem:[%s219 + $0xe0] sm:$0xff]
      %v254 = vld [vmem:[%s219 + $0xe8] sm:$0xff]
      %v255 = vld [vmem:[%s219 + $0xf0] sm:$0xff]
      %v256 = vld [vmem:[%s219 + $0xf8] sm:$0xff]
      %vm257 = vcmask 31744
      %258 = vst.msk [vmem:[#allocation2] sm:$0xff] %vm257, 0.0
      %259 = vst.msk [vmem:[#allocation2 + $0x8] sm:$0xff] %vm257, 0.0
      %vm260 = vcmask 25600
      %261 = vst.msk [vmem:[#allocation2 + $0x10] sm:$0x3] %vm260, 0.0
      %262 = vst.msk [vmem:[#allocation2 + $0x18] sm:$0xff] %vm257, 0.0
      %263 = vst.msk [vmem:[#allocation2 + $0x20] sm:$0xff] %vm257, 0.0
      %264 = vst.msk [vmem:[#allocation2 + $0x28] sm:$0x3] %vm260, 0.0
      %265 = vst.msk [vmem:[#allocation2 + $0x30] sm:$0xff] %vm257, 0.0
      %266 = vst.msk [vmem:[#allocation2 + $0x38] sm:$0xff] %vm257, 0.0
      %267 = vst.msk [vmem:[#allocation2 + $0x40] sm:$0x3] %vm260, 0.0
      %268 = vst.msk [vmem:[#allocation2 + $0x48] sm:$0xff] %vm257, 0.0
      %269 = vst.msk [vmem:[#allocation2 + $0x50] sm:$0xff] %vm257, 0.0
      %270 = vst.msk [vmem:[#allocation2 + $0x58] sm:$0x3] %vm260, 0.0
      %271 = vst.msk [vmem:[#allocation2 + $0x60] sm:$0xff] %vm257, 0.0
      %272 = vst.msk [vmem:[#allocation2 + $0x68] sm:$0xff] %vm257, 0.0
      %273 = vst.msk [vmem:[#allocation2 + $0x70] sm:$0x3] %vm260, 0.0
      %274 = vst.msk [vmem:[#allocation2 + $0x78] sm:$0xff] %vm257, 0.0
      %275 = vst.msk [vmem:[#allocation2 + $0x80] sm:$0xff] %vm257, 0.0
      %276 = vst.msk [vmem:[#allocation2 + $0x88] sm:$0x3] %vm260, 0.0
      %277 = vst.msk [vmem:[#allocation2 + $0x90] sm:$0xff] %vm257, 0.0
      %278 = vst.msk [vmem:[#allocation2 + $0x98] sm:$0xff] %vm257, 0.0
      %279 = vst.msk [vmem:[#allocation2 + $0xa0] sm:$0x3] %vm260, 0.0
      %280 = vst.msk [vmem:[#allocation2 + $0xa8] sm:$0xff] %vm257, 0.0
      %281 = vst.msk [vmem:[#allocation2 + $0xb0] sm:$0xff] %vm257, 0.0
      %282 = vst.msk [vmem:[#allocation2 + $0xb8] sm:$0x3] %vm260, 0.0
      %283 = vst.msk [vmem:[#allocation2 + $0xc0] sm:$0xff] %vm257, 0.0
      %284 = vst.msk [vmem:[#allocation2 + $0xc8] sm:$0xff] %vm257, 0.0
      %285 = vst.msk [vmem:[#allocation2 + $0xd0] sm:$0x3] %vm260, 0.0
      %286 = vst.msk [vmem:[#allocation2 + $0xd8] sm:$0xff] %vm257, 0.0
      %287 = vst.msk [vmem:[#allocation2 + $0xe0] sm:$0xff] %vm257, 0.0
      %288 = vst.msk [vmem:[#allocation2 + $0xe8] sm:$0x3] %vm260, 0.0
      %289 = vst.msk [vmem:[#allocation2 + $0xf0] sm:$0xff] %vm257, 0.0
      %290 = vst.msk [vmem:[#allocation2 + $0xf8] sm:$0xff] %vm257, 0.0
      %291 = vst.msk [vmem:[#allocation2 + $0x100] sm:$0x3] %vm260, 0.0
      %292 = vst.msk [vmem:[#allocation2 + $0x108] sm:$0xff] %vm257, 0.0
      %293 = vst.msk [vmem:[#allocation2 + $0x110] sm:$0xff] %vm257, 0.0
      %294 = vst.msk [vmem:[#allocation2 + $0x118] sm:$0x3] %vm260, 0.0
      %295 = vst.msk [vmem:[#allocation2 + $0x120] sm:$0xff] %vm257, 0.0
      %296 = vst.msk [vmem:[#allocation2 + $0x128] sm:$0xff] %vm257, 0.0
      %297 = vst.msk [vmem:[#allocation2 + $0x130] sm:$0x3] %vm260, 0.0
      %298 = vst.msk [vmem:[#allocation2 + $0x138] sm:$0xff] %vm257, 0.0
      %299 = vst.msk [vmem:[#allocation2 + $0x140] sm:$0xff] %vm257, 0.0
      %300 = vst.msk [vmem:[#allocation2 + $0x148] sm:$0x3] %vm260, 0.0
      %301 = vst.msk [vmem:[#allocation2 + $0x150] sm:$0xff] %vm257, 0.0
      %302 = vst.msk [vmem:[#allocation2 + $0x158] sm:$0xff] %vm257, 0.0
      %303 = vst.msk [vmem:[#allocation2 + $0x160] sm:$0x3] %vm260, 0.0
      %304 = vst.msk [vmem:[#allocation2 + $0x168] sm:$0xff] %vm257, 0.0
      %305 = vst.msk [vmem:[#allocation2 + $0x170] sm:$0xff] %vm257, 0.0
      %306 = vst.msk [vmem:[#allocation2 + $0x178] sm:$0x3] %vm260, 0.0
      %307 = vst.msk [vmem:[#allocation2 + $0x180] sm:$0xff] %vm257, 0.0
      %308 = vst.msk [vmem:[#allocation2 + $0x188] sm:$0xff] %vm257, 0.0
      %309 = vst.msk [vmem:[#allocation2 + $0x190] sm:$0x3] %vm260, 0.0
      %310 = vst.msk [vmem:[#allocation2 + $0x198] sm:$0xff] %vm257, 0.0
      %311 = vst.msk [vmem:[#allocation2 + $0x1a0] sm:$0xff] %vm257, 0.0
      %312 = vst.msk [vmem:[#allocation2 + $0x1a8] sm:$0x3] %vm260, 0.0
      %s313 = scalar_lea.vmem [#allocation2], 24
      %314 = vst.msk [vmem:[%s313 + $0x1] sm:$0xff] %vm257, %v225
      %315 = vst.msk [vmem:[%s313 + $0x9] sm:$0xff] %vm257, %v226
      %316 = vst.msk [vmem:[%s313 + $0x19] sm:$0xff] %vm257, %v227
      %317 = vst.msk [vmem:[%s313 + $0x21] sm:$0xff] %vm257, %v228
      %318 = vst.msk [vmem:[%s313 + $0x31] sm:$0xff] %vm257, %v229
      %319 = vst.msk [vmem:[%s313 + $0x39] sm:$0xff] %vm257, %v230
      %320 = vst.msk [vmem:[%s313 + $0x49] sm:$0xff] %vm257, %v231
      %321 = vst.msk [vmem:[%s313 + $0x51] sm:$0xff] %vm257, %v232
      %322 = vst.msk [vmem:[%s313 + $0x61] sm:$0xff] %vm257, %v233
      %323 = vst.msk [vmem:[%s313 + $0x69] sm:$0xff] %vm257, %v234
      %324 = vst.msk [vmem:[%s313 + $0x79] sm:$0xff] %vm257, %v235
      %325 = vst.msk [vmem:[%s313 + $0x81] sm:$0xff] %vm257, %v236
      %326 = vst.msk [vmem:[%s313 + $0x91] sm:$0xff] %vm257, %v237
      %327 = vst.msk [vmem:[%s313 + $0x99] sm:$0xff] %vm257, %v238
      %328 = vst.msk [vmem:[%s313 + $0xa9] sm:$0xff] %vm257, %v239
      %329 = vst.msk [vmem:[%s313 + $0xb1] sm:$0xff] %vm257, %v240
      %330 = vst.msk [vmem:[%s313 + $0xc1] sm:$0xff] %vm257, %v241
      %331 = vst.msk [vmem:[%s313 + $0xc9] sm:$0xff] %vm257, %v242
      %332 = vst.msk [vmem:[%s313 + $0xd9] sm:$0xff] %vm257, %v243
      %333 = vst.msk [vmem:[%s313 + $0xe1] sm:$0xff] %vm257, %v244
      %334 = vst.msk [vmem:[%s313 + $0xf1] sm:$0xff] %vm257, %v245
      %335 = vst.msk [vmem:[%s313 + $0xf9] sm:$0xff] %vm257, %v246
      %336 = vst.msk [vmem:[%s313 + $0x109] sm:$0xff] %vm257, %v247
      %337 = vst.msk [vmem:[%s313 + $0x111] sm:$0xff] %vm257, %v248
      %338 = vst.msk [vmem:[%s313 + $0x121] sm:$0xff] %vm257, %v249
      %339 = vst.msk [vmem:[%s313 + $0x129] sm:$0xff] %vm257, %v250
      %340 = vst.msk [vmem:[%s313 + $0x139] sm:$0xff] %vm257, %v251
      %341 = vst.msk [vmem:[%s313 + $0x141] sm:$0xff] %vm257, %v252
      %342 = vst.msk [vmem:[%s313 + $0x151] sm:$0xff] %vm257, %v253
      %343 = vst.msk [vmem:[%s313 + $0x159] sm:$0xff] %vm257, %v254
      %344 = vst.msk [vmem:[%s313 + $0x169] sm:$0xff] %vm257, %v255
      %345 = vst.msk [vmem:[%s313 + $0x171] sm:$0xff] %vm257, %v256
      %v346 = vld [vmem:[#allocation2] sm:$0xff]
      %v347 = vld [vmem:[#allocation2 + $0x8] sm:$0xff]
      %v348 = vld [vmem:[#allocation2 + $0x18] sm:$0xff]
      %v349 = vld [vmem:[#allocation2 + $0x20] sm:$0xff]
      %v350 = vld [vmem:[#allocation2 + $0x30] sm:$0xff]
      %v351 = vld [vmem:[#allocation2 + $0x38] sm:$0xff]
      %v352 = vld [vmem:[#allocation2 + $0x48] sm:$0xff]
      %v353 = vld [vmem:[#allocation2 + $0x50] sm:$0xff]
      %v354 = vld [vmem:[#allocation2 + $0x60] sm:$0xff]
      %v355 = vld [vmem:[#allocation2 + $0x68] sm:$0xff]
      %v356 = vld [vmem:[#allocation2 + $0x78] sm:$0xff]
      %v357 = vld [vmem:[#allocation2 + $0x80] sm:$0xff]
      %v358 = vld [vmem:[#allocation2 + $0x90] sm:$0xff]
      %v359 = vld [vmem:[#allocation2 + $0x98] sm:$0xff]
      %v360 = vld [vmem:[#allocation2 + $0xa8] sm:$0xff]
      %v361 = vld [vmem:[#allocation2 + $0xb0] sm:$0xff]
      %v362 = vld [vmem:[#allocation2 + $0xc0] sm:$0xff]
      %v363 = vld [vmem:[#allocation2 + $0xc8] sm:$0xff]
      %v364 = vld [vmem:[#allocation2 + $0xd8] sm:$0xff]
      %v365 = vld [vmem:[#allocation2 + $0xe0] sm:$0xff]
      %v366 = vld [vmem:[#allocation2 + $0xf0] sm:$0xff]
      %v367 = vld [vmem:[#allocation2 + $0xf8] sm:$0xff]
      %v368 = vld [vmem:[#allocation2 + $0x108] sm:$0xff]
      %v369 = vld [vmem:[#allocation2 + $0x110] sm:$0xff]
      %v370 = vld [vmem:[#allocation2 + $0x120] sm:$0xff]
      %v371 = vld [vmem:[#allocation2 + $0x128] sm:$0xff]
      %v372 = vld [vmem:[#allocation2 + $0x138] sm:$0xff]
      %v373 = vld [vmem:[#allocation2 + $0x140] sm:$0xff]
      %v374 = vld [vmem:[#allocation2 + $0x150] sm:$0xff]
      %v375 = vld [vmem:[#allocation2 + $0x158] sm:$0xff]
      %v376 = vld [vmem:[#allocation2 + $0x168] sm:$0xff]
      %v377 = vld [vmem:[#allocation2 + $0x170] sm:$0xff]
      %v378 = vld [vmem:[%s1] sm:$0x1]
      %v379 = vlaneseq
      %v380 = vshrl.u32 %v379, 7
      %v381 = vsub.s32 0, %v380
      %v382 = vrot.slane %v378, %v381
      %v383 = vmul.f32 %v346, %v382
      %v384 = vmul.f32 %v347, %v382
      %v385 = vmul.f32 %v348, %v382
      %v386 = vmul.f32 %v349, %v382
      %v387 = vmul.f32 %v350, %v382
      %v388 = vmul.f32 %v351, %v382
      %v389 = vmul.f32 %v352, %v382
      %v390 = vmul.f32 %v353, %v382
      %v391 = vmul.f32 %v354, %v382
      %v392 = vmul.f32 %v355, %v382
      %v393 = vmul.f32 %v356, %v382
      %v394 = vmul.f32 %v357, %v382
      %v395 = vmul.f32 %v358, %v382
      %v396 = vmul.f32 %v359, %v382
      %v397 = vmul.f32 %v360, %v382
      %v398 = vmul.f32 %v361, %v382
      %v399 = vmul.f32 %v362, %v382
      %v400 = vmul.f32 %v363, %v382
      %v401 = vmul.f32 %v364, %v382
      %v402 = vmul.f32 %v365, %v382
      %v403 = vmul.f32 %v366, %v382
      %v404 = vmul.f32 %v367, %v382
      %v405 = vmul.f32 %v368, %v382
      %v406 = vmul.f32 %v369, %v382
      %v407 = vmul.f32 %v370, %v382
      %v408 = vmul.f32 %v371, %v382
      %v409 = vmul.f32 %v372, %v382
      %v410 = vmul.f32 %v373, %v382
      %v411 = vmul.f32 %v374, %v382
      %v412 = vmul.f32 %v375, %v382
      %v413 = vmul.f32 %v376, %v382
      %v414 = vmul.f32 %v377, %v382
      %v415 = vadd.f32 %v383, 0.0
      %v416 = vadd.f32 %v384, 0.0
      %v417 = vadd.f32 %v385, 0.0
      %v418 = vadd.f32 %v386, 0.0
      %v419 = vadd.f32 %v387, 0.0
      %v420 = vadd.f32 %v388, 0.0
      %v421 = vadd.f32 %v389, 0.0
      %v422 = vadd.f32 %v390, 0.0
      %v423 = vadd.f32 %v391, 0.0
      %v424 = vadd.f32 %v392, 0.0
      %v425 = vadd.f32 %v393, 0.0
      %v426 = vadd.f32 %v394, 0.0
      %v427 = vadd.f32 %v395, 0.0
      %v428 = vadd.f32 %v396, 0.0
      %v429 = vadd.f32 %v397, 0.0
      %v430 = vadd.f32 %v398, 0.0
      %v431 = vadd.f32 %v399, 0.0
      %v432 = vadd.f32 %v400, 0.0
      %v433 = vadd.f32 %v401, 0.0
      %v434 = vadd.f32 %v402, 0.0
      %v435 = vadd.f32 %v403, 0.0
      %v436 = vadd.f32 %v404, 0.0
      %v437 = vadd.f32 %v405, 0.0
      %v438 = vadd.f32 %v406, 0.0
      %v439 = vadd.f32 %v407, 0.0
      %v440 = vadd.f32 %v408, 0.0
      %v441 = vadd.f32 %v409, 0.0
      %v442 = vadd.f32 %v410, 0.0
      %v443 = vadd.f32 %v411, 0.0
      %v444 = vadd.f32 %v412, 0.0
      %v445 = vadd.f32 %v413, 0.0
      %v446 = vadd.f32 %v414, 0.0
      %v447 = vld [vmem:[#allocation2 + $0x1] sm:$0xff]
      %v448 = vld [vmem:[#allocation2 + $0x9] sm:$0xff]
      %v449 = vld [vmem:[#allocation2 + $0x19] sm:$0xff]
      %v450 = vld [vmem:[#allocation2 + $0x21] sm:$0xff]
      %v451 = vld [vmem:[#allocation2 + $0x31] sm:$0xff]
      %v452 = vld [vmem:[#allocation2 + $0x39] sm:$0xff]
      %v453 = vld [vmem:[#allocation2 + $0x49] sm:$0xff]
      %v454 = vld [vmem:[#allocation2 + $0x51] sm:$0xff]
      %v455 = vld [vmem:[#allocation2 + $0x61] sm:$0xff]
      %v456 = vld [vmem:[#allocation2 + $0x69] sm:$0xff]
      %v457 = vld [vmem:[#allocation2 + $0x79] sm:$0xff]
      %v458 = vld [vmem:[#allocation2 + $0x81] sm:$0xff]
      %v459 = vld [vmem:[#allocation2 + $0x91] sm:$0xff]
      %v460 = vld [vmem:[#allocation2 + $0x99] sm:$0xff]
      %v461 = vld [vmem:[#allocation2 + $0xa9] sm:$0xff]
      %v462 = vld [vmem:[#allocation2 + $0xb1] sm:$0xff]
      %v463 = vld [vmem:[#allocation2 + $0xc1] sm:$0xff]
      %v464 = vld [vmem:[#allocation2 + $0xc9] sm:$0xff]
      %v465 = vld [vmem:[#allocation2 + $0xd9] sm:$0xff]
      %v466 = vld [vmem:[#allocation2 + $0xe1] sm:$0xff]
      %v467 = vld [vmem:[#allocation2 + $0xf1] sm:$0xff]
      %v468 = vld [vmem:[#allocation2 + $0xf9] sm:$0xff]
      %v469 = vld [vmem:[#allocation2 + $0x109] sm:$0xff]
      %v470 = vld [vmem:[#allocation2 + $0x111] sm:$0xff]
      %v471 = vld [vmem:[#allocation2 + $0x121] sm:$0xff]
      %v472 = vld [vmem:[#allocation2 + $0x129] sm:$0xff]
      %v473 = vld [vmem:[#allocation2 + $0x139] sm:$0xff]
      %v474 = vld [vmem:[#allocation2 + $0x141] sm:$0xff]
      %v475 = vld [vmem:[#allocation2 + $0x151] sm:$0xff]
      %v476 = vld [vmem:[#allocation2 + $0x159] sm:$0xff]
      %v477 = vld [vmem:[#allocation2 + $0x169] sm:$0xff]
      %v478 = vld [vmem:[#allocation2 + $0x171] sm:$0xff]
      %v479 = vld [vmem:[%s1 + $0x1] sm:$0x1]
      %v480 = vlaneseq
      %v481 = vshrl.u32 %v480, 7
      %v482 = vsub.s32 0, %v481
      %v483 = vrot.slane %v479, %v482
      %v484 = vmul.f32 %v447, %v483
      %v485 = vmul.f32 %v448, %v483
      %v486 = vmul.f32 %v449, %v483
      %v487 = vmul.f32 %v450, %v483
      %v488 = vmul.f32 %v451, %v483
      %v489 = vmul.f32 %v452, %v483
      %v490 = vmul.f32 %v453, %v483
      %v491 = vmul.f32 %v454, %v483
      %v492 = vmul.f32 %v455, %v483
      %v493 = vmul.f32 %v456, %v483
      %v494 = vmul.f32 %v457, %v483
      %v495 = vmul.f32 %v458, %v483
      %v496 = vmul.f32 %v459, %v483
      %v497 = vmul.f32 %v460, %v483
      %v498 = vmul.f32 %v461, %v483
      %v499 = vmul.f32 %v462, %v483
      %v500 = vmul.f32 %v463, %v483
      %v501 = vmul.f32 %v464, %v483
      %v502 = vmul.f32 %v465, %v483
      %v503 = vmul.f32 %v466, %v483
      %v504 = vmul.f32 %v467, %v483
      %v505 = vmul.f32 %v468, %v483
      %v506 = vmul.f32 %v469, %v483
      %v507 = vmul.f32 %v470, %v483
      %v508 = vmul.f32 %v471, %v483
      %v509 = vmul.f32 %v472, %v483
      %v510 = vmul.f32 %v473, %v483
      %v511 = vmul.f32 %v474, %v483
      %v512 = vmul.f32 %v475, %v483
      %v513 = vmul.f32 %v476, %v483
      %v514 = vmul.f32 %v477, %v483
      %v515 = vmul.f32 %v478, %v483
      %v516 = vadd.f32 %v415, %v484
      %v517 = vadd.f32 %v416, %v485
      %v518 = vadd.f32 %v417, %v486
      %v519 = vadd.f32 %v418, %v487
      %v520 = vadd.f32 %v419, %v488
      %v521 = vadd.f32 %v420, %v489
      %v522 = vadd.f32 %v421, %v490
      %v523 = vadd.f32 %v422, %v491
      %v524 = vadd.f32 %v423, %v492
      %v525 = vadd.f32 %v424, %v493
      %v526 = vadd.f32 %v425, %v494
      %v527 = vadd.f32 %v426, %v495
      %v528 = vadd.f32 %v427, %v496
      %v529 = vadd.f32 %v428, %v497
      %v530 = vadd.f32 %v429, %v498
      %v531 = vadd.f32 %v430, %v499
      %v532 = vadd.f32 %v431, %v500
      %v533 = vadd.f32 %v432, %v501
      %v534 = vadd.f32 %v433, %v502
      %v535 = vadd.f32 %v434, %v503
      %v536 = vadd.f32 %v435, %v504
      %v537 = vadd.f32 %v436, %v505
      %v538 = vadd.f32 %v437, %v506
      %v539 = vadd.f32 %v438, %v507
      %v540 = vadd.f32 %v439, %v508
      %v541 = vadd.f32 %v440, %v509
      %v542 = vadd.f32 %v441, %v510
      %v543 = vadd.f32 %v442, %v511
      %v544 = vadd.f32 %v443, %v512
      %v545 = vadd.f32 %v444, %v513
      %v546 = vadd.f32 %v445, %v514
      %v547 = vadd.f32 %v446, %v515
      %v548 = vld [vmem:[#allocation2 + $0x2] sm:$0xff]
      %v549 = vld [vmem:[#allocation2 + $0xa] sm:$0xff]
      %v550 = vld [vmem:[#allocation2 + $0x1a] sm:$0xff]
      %v551 = vld [vmem:[#allocation2 + $0x22] sm:$0xff]
      %v552 = vld [vmem:[#allocation2 + $0x32] sm:$0xff]
      %v553 = vld [vmem:[#allocation2 + $0x3a] sm:$0xff]
      %v554 = vld [vmem:[#allocation2 + $0x4a] sm:$0xff]
      %v555 = vld [vmem:[#allocation2 + $0x52] sm:$0xff]
      %v556 = vld [vmem:[#allocation2 + $0x62] sm:$0xff]
      %v557 = vld [vmem:[#allocation2 + $0x6a] sm:$0xff]
      %v558 = vld [vmem:[#allocation2 + $0x7a] sm:$0xff]
      %v559 = vld [vmem:[#allocation2 + $0x82] sm:$0xff]
      %v560 = vld [vmem:[#allocation2 + $0x92] sm:$0xff]
      %v561 = vld [vmem:[#allocation2 + $0x9a] sm:$0xff]
      %v562 = vld [vmem:[#allocation2 + $0xaa] sm:$0xff]
      %v563 = vld [vmem:[#allocation2 + $0xb2] sm:$0xff]
      %v564 = vld [vmem:[#allocation2 + $0xc2] sm:$0xff]
      %v565 = vld [vmem:[#allocation2 + $0xca] sm:$0xff]
      %v566 = vld [vmem:[#allocation2 + $0xda] sm:$0xff]
      %v567 = vld [vmem:[#allocation2 + $0xe2] sm:$0xff]
      %v568 = vld [vmem:[#allocation2 + $0xf2] sm:$0xff]
      %v569 = vld [vmem:[#allocation2 + $0xfa] sm:$0xff]
      %v570 = vld [vmem:[#allocation2 + $0x10a] sm:$0xff]
      %v571 = vld [vmem:[#allocation2 + $0x112] sm:$0xff]
      %v572 = vld [vmem:[#allocation2 + $0x122] sm:$0xff]
      %v573 = vld [vmem:[#allocation2 + $0x12a] sm:$0xff]
      %v574 = vld [vmem:[#allocation2 + $0x13a] sm:$0xff]
      %v575 = vld [vmem:[#allocation2 + $0x142] sm:$0xff]
      %v576 = vld [vmem:[#allocation2 + $0x152] sm:$0xff]
      %v577 = vld [vmem:[#allocation2 + $0x15a] sm:$0xff]
      %v578 = vld [vmem:[#allocation2 + $0x16a] sm:$0xff]
      %v579 = vld [vmem:[#allocation2 + $0x172] sm:$0xff]
      %v580 = vld [vmem:[%s1 + $0x2] sm:$0x1]
      %v581 = vlaneseq
      %v582 = vshrl.u32 %v581, 7
      %v583 = vsub.s32 0, %v582
      %v584 = vrot.slane %v580, %v583
      %v585 = vmul.f32 %v548, %v584
      %v586 = vmul.f32 %v549, %v584
      %v587 = vmul.f32 %v550, %v584
      %v588 = vmul.f32 %v551, %v584
      %v589 = vmul.f32 %v552, %v584
      %v590 = vmul.f32 %v553, %v584
      %v591 = vmul.f32 %v554, %v584
      %v592 = vmul.f32 %v555, %v584
      %v593 = vmul.f32 %v556, %v584
      %v594 = vmul.f32 %v557, %v584
      %v595 = vmul.f32 %v558, %v584
      %v596 = vmul.f32 %v559, %v584
      %v597 = vmul.f32 %v560, %v584
      %v598 = vmul.f32 %v561, %v584
      %v599 = vmul.f32 %v562, %v584
      %v600 = vmul.f32 %v563, %v584
      %v601 = vmul.f32 %v564, %v584
      %v602 = vmul.f32 %v565, %v584
      %v603 = vmul.f32 %v566, %v584
      %v604 = vmul.f32 %v567, %v584
      %v605 = vmul.f32 %v568, %v584
      %v606 = vmul.f32 %v569, %v584
      %v607 = vmul.f32 %v570, %v584
      %v608 = vmul.f32 %v571, %v584
      %v609 = vmul.f32 %v572, %v584
      %v610 = vmul.f32 %v573, %v584
      %v611 = vmul.f32 %v574, %v584
      %v612 = vmul.f32 %v575, %v584
      %v613 = vmul.f32 %v576, %v584
      %v614 = vmul.f32 %v577, %v584
      %v615 = vmul.f32 %v578, %v584
      %v616 = vmul.f32 %v579, %v584
      %v617 = vadd.f32 %v516, %v585
      %v618 = vadd.f32 %v517, %v586
      %v619 = vadd.f32 %v518, %v587
      %v620 = vadd.f32 %v519, %v588
      %v621 = vadd.f32 %v520, %v589
      %v622 = vadd.f32 %v521, %v590
      %v623 = vadd.f32 %v522, %v591
      %v624 = vadd.f32 %v523, %v592
      %v625 = vadd.f32 %v524, %v593
      %v626 = vadd.f32 %v525, %v594
      %v627 = vadd.f32 %v526, %v595
      %v628 = vadd.f32 %v527, %v596
      %v629 = vadd.f32 %v528, %v597
      %v630 = vadd.f32 %v529, %v598
      %v631 = vadd.f32 %v530, %v599
      %v632 = vadd.f32 %v531, %v600
      %v633 = vadd.f32 %v532, %v601
      %v634 = vadd.f32 %v533, %v602
      %v635 = vadd.f32 %v534, %v603
      %v636 = vadd.f32 %v535, %v604
      %v637 = vadd.f32 %v536, %v605
      %v638 = vadd.f32 %v537, %v606
      %v639 = vadd.f32 %v538, %v607
      %v640 = vadd.f32 %v539, %v608
      %v641 = vadd.f32 %v540, %v609
      %v642 = vadd.f32 %v541, %v610
      %v643 = vadd.f32 %v542, %v611
      %v644 = vadd.f32 %v543, %v612
      %v645 = vadd.f32 %v544, %v613
      %v646 = vadd.f32 %v545, %v614
      %v647 = vadd.f32 %v546, %v615
      %v648 = vadd.f32 %v547, %v616
      %v649 = vld [vmem:[%s313] sm:$0xff]
      %v650 = vld [vmem:[%s313 + $0x8] sm:$0xff]
      %v651 = vld [vmem:[%s313 + $0x18] sm:$0xff]
      %v652 = vld [vmem:[%s313 + $0x20] sm:$0xff]
      %v653 = vld [vmem:[%s313 + $0x30] sm:$0xff]
      %v654 = vld [vmem:[%s313 + $0x38] sm:$0xff]
      %v655 = vld [vmem:[%s313 + $0x48] sm:$0xff]
      %v656 = vld [vmem:[%s313 + $0x50] sm:$0xff]
      %v657 = vld [vmem:[%s313 + $0x60] sm:$0xff]
      %v658 = vld [vmem:[%s313 + $0x68] sm:$0xff]
      %v659 = vld [vmem:[%s313 + $0x78] sm:$0xff]
      %v660 = vld [vmem:[%s313 + $0x80] sm:$0xff]
      %v661 = vld [vmem:[%s313 + $0x90] sm:$0xff]
      %v662 = vld [vmem:[%s313 + $0x98] sm:$0xff]
      %v663 = vld [vmem:[%s313 + $0xa8] sm:$0xff]
      %v664 = vld [vmem:[%s313 + $0xb0] sm:$0xff]
      %v665 = vld [vmem:[%s313 + $0xc0] sm:$0xff]
      %v666 = vld [vmem:[%s313 + $0xc8] sm:$0xff]
      %v667 = vld [vmem:[%s313 + $0xd8] sm:$0xff]
      %v668 = vld [vmem:[%s313 + $0xe0] sm:$0xff]
      %v669 = vld [vmem:[%s313 + $0xf0] sm:$0xff]
      %v670 = vld [vmem:[%s313 + $0xf8] sm:$0xff]
      %v671 = vld [vmem:[%s313 + $0x108] sm:$0xff]
      %v672 = vld [vmem:[%s313 + $0x110] sm:$0xff]
      %v673 = vld [vmem:[%s313 + $0x120] sm:$0xff]
      %v674 = vld [vmem:[%s313 + $0x128] sm:$0xff]
      %v675 = vld [vmem:[%s313 + $0x138] sm:$0xff]
      %v676 = vld [vmem:[%s313 + $0x140] sm:$0xff]
      %v677 = vld [vmem:[%s313 + $0x150] sm:$0xff]
      %v678 = vld [vmem:[%s313 + $0x158] sm:$0xff]
      %v679 = vld [vmem:[%s313 + $0x168] sm:$0xff]
      %v680 = vld [vmem:[%s313 + $0x170] sm:$0xff]
      %v681 = vld [vmem:[%s1 + $0x3] sm:$0x1]
      %v682 = vlaneseq
      %v683 = vshrl.u32 %v682, 7
      %v684 = vsub.s32 0, %v683
      %v685 = vrot.slane %v681, %v684
      %v686 = vmul.f32 %v649, %v685
      %v687 = vmul.f32 %v650, %v685
      %v688 = vmul.f32 %v651, %v685
      %v689 = vmul.f32 %v652, %v685
      %v690 = vmul.f32 %v653, %v685
      %v691 = vmul.f32 %v654, %v685
      %v692 = vmul.f32 %v655, %v685
      %v693 = vmul.f32 %v656, %v685
      %v694 = vmul.f32 %v657, %v685
      %v695 = vmul.f32 %v658, %v685
      %v696 = vmul.f32 %v659, %v685
      %v697 = vmul.f32 %v660, %v685
      %v698 = vmul.f32 %v661, %v685
      %v699 = vmul.f32 %v662, %v685
      %v700 = vmul.f32 %v663, %v685
      %v701 = vmul.f32 %v664, %v685
      %v702 = vmul.f32 %v665, %v685
      %v703 = vmul.f32 %v666, %v685
      %v704 = vmul.f32 %v667, %v685
      %v705 = vmul.f32 %v668, %v685
      %v706 = vmul.f32 %v669, %v685
      %v707 = vmul.f32 %v670, %v685
      %v708 = vmul.f32 %v671, %v685
      %v709 = vmul.f32 %v672, %v685
      %v710 = vmul.f32 %v673, %v685
      %v711 = vmul.f32 %v674, %v685
      %v712 = vmul.f32 %v675, %v685
      %v713 = vmul.f32 %v676, %v685
      %v714 = vmul.f32 %v677, %v685
      %v715 = vmul.f32 %v678, %v685
      %v716 = vmul.f32 %v679, %v685
      %v717 = vmul.f32 %v680, %v685
      %v718 = vadd.f32 %v617, %v686
      %v719 = vadd.f32 %v618, %v687
      %v720 = vadd.f32 %v619, %v688
      %v721 = vadd.f32 %v620, %v689
      %v722 = vadd.f32 %v621, %v690
      %v723 = vadd.f32 %v622, %v691
      %v724 = vadd.f32 %v623, %v692
      %v725 = vadd.f32 %v624, %v693
      %v726 = vadd.f32 %v625, %v694
      %v727 = vadd.f32 %v626, %v695
      %v728 = vadd.f32 %v627, %v696
      %v729 = vadd.f32 %v628, %v697
      %v730 = vadd.f32 %v629, %v698
      %v731 = vadd.f32 %v630, %v699
      %v732 = vadd.f32 %v631, %v700
      %v733 = vadd.f32 %v632, %v701
      %v734 = vadd.f32 %v633, %v702
      %v735 = vadd.f32 %v634, %v703
      %v736 = vadd.f32 %v635, %v704
      %v737 = vadd.f32 %v636, %v705
      %v738 = vadd.f32 %v637, %v706
      %v739 = vadd.f32 %v638, %v707
      %v740 = vadd.f32 %v639, %v708
      %v741 = vadd.f32 %v640, %v709
      %v742 = vadd.f32 %v641, %v710
      %v743 = vadd.f32 %v642, %v711
      %v744 = vadd.f32 %v643, %v712
      %v745 = vadd.f32 %v644, %v713
      %v746 = vadd.f32 %v645, %v714
      %v747 = vadd.f32 %v646, %v715
      %v748 = vadd.f32 %v647, %v716
      %v749 = vadd.f32 %v648, %v717
      %v750 = vld [vmem:[%s313 + $0x1] sm:$0xff]
      %v751 = vld [vmem:[%s313 + $0x9] sm:$0xff]
      %v752 = vld [vmem:[%s313 + $0x19] sm:$0xff]
      %v753 = vld [vmem:[%s313 + $0x21] sm:$0xff]
      %v754 = vld [vmem:[%s313 + $0x31] sm:$0xff]
      %v755 = vld [vmem:[%s313 + $0x39] sm:$0xff]
      %v756 = vld [vmem:[%s313 + $0x49] sm:$0xff]
      %v757 = vld [vmem:[%s313 + $0x51] sm:$0xff]
      %v758 = vld [vmem:[%s313 + $0x61] sm:$0xff]
      %v759 = vld [vmem:[%s313 + $0x69] sm:$0xff]
      %v760 = vld [vmem:[%s313 + $0x79] sm:$0xff]
      %v761 = vld [vmem:[%s313 + $0x81] sm:$0xff]
      %v762 = vld [vmem:[%s313 + $0x91] sm:$0xff]
      %v763 = vld [vmem:[%s313 + $0x99] sm:$0xff]
      %v764 = vld [vmem:[%s313 + $0xa9] sm:$0xff]
      %v765 = vld [vmem:[%s313 + $0xb1] sm:$0xff]
      %v766 = vld [vmem:[%s313 + $0xc1] sm:$0xff]
      %v767 = vld [vmem:[%s313 + $0xc9] sm:$0xff]
      %v768 = vld [vmem:[%s313 + $0xd9] sm:$0xff]
      %v769 = vld [vmem:[%s313 + $0xe1] sm:$0xff]
      %v770 = vld [vmem:[%s313 + $0xf1] sm:$0xff]
      %v771 = vld [vmem:[%s313 + $0xf9] sm:$0xff]
      %v772 = vld [vmem:[%s313 + $0x109] sm:$0xff]
      %v773 = vld [vmem:[%s313 + $0x111] sm:$0xff]
      %v774 = vld [vmem:[%s313 + $0x121] sm:$0xff]
      %v775 = vld [vmem:[%s313 + $0x129] sm:$0xff]
      %v776 = vld [vmem:[%s313 + $0x139] sm:$0xff]
      %v777 = vld [vmem:[%s313 + $0x141] sm:$0xff]
      %v778 = vld [vmem:[%s313 + $0x151] sm:$0xff]
      %v779 = vld [vmem:[%s313 + $0x159] sm:$0xff]
      %v780 = vld [vmem:[%s313 + $0x169] sm:$0xff]
      %v781 = vld [vmem:[%s313 + $0x171] sm:$0xff]
      %v782 = vld [vmem:[%s1 + $0x4] sm:$0x1]
      %v783 = vlaneseq
      %v784 = vshrl.u32 %v783, 7
      %v785 = vsub.s32 0, %v784
      %v786 = vrot.slane %v782, %v785
      %v787 = vmul.f32 %v750, %v786
      %v788 = vmul.f32 %v751, %v786
      %v789 = vmul.f32 %v752, %v786
      %v790 = vmul.f32 %v753, %v786
      %v791 = vmul.f32 %v754, %v786
      %v792 = vmul.f32 %v755, %v786
      %v793 = vmul.f32 %v756, %v786
      %v794 = vmul.f32 %v757, %v786
      %v795 = vmul.f32 %v758, %v786
      %v796 = vmul.f32 %v759, %v786
      %v797 = vmul.f32 %v760, %v786
      %v798 = vmul.f32 %v761, %v786
      %v799 = vmul.f32 %v762, %v786
      %v800 = vmul.f32 %v763, %v786
      %v801 = vmul.f32 %v764, %v786
      %v802 = vmul.f32 %v765, %v786
      %v803 = vmul.f32 %v766, %v786
      %v804 = vmul.f32 %v767, %v786
      %v805 = vmul.f32 %v768, %v786
      %v806 = vmul.f32 %v769, %v786
      %v807 = vmul.f32 %v770, %v786
      %v808 = vmul.f32 %v771, %v786
      %v809 = vmul.f32 %v772, %v786
      %v810 = vmul.f32 %v773, %v786
      %v811 = vmul.f32 %v774, %v786
      %v812 = vmul.f32 %v775, %v786
      %v813 = vmul.f32 %v776, %v786
      %v814 = vmul.f32 %v777, %v786
      %v815 = vmul.f32 %v778, %v786
      %v816 = vmul.f32 %v779, %v786
      %v817 = vmul.f32 %v780, %v786
      %v818 = vmul.f32 %v781, %v786
      %v819 = vadd.f32 %v718, %v787
      %v820 = vadd.f32 %v719, %v788
      %v821 = vadd.f32 %v720, %v789
      %v822 = vadd.f32 %v721, %v790
      %v823 = vadd.f32 %v722, %v791
      %v824 = vadd.f32 %v723, %v792
      %v825 = vadd.f32 %v724, %v793
      %v826 = vadd.f32 %v725, %v794
      %v827 = vadd.f32 %v726, %v795
      %v828 = vadd.f32 %v727, %v796
      %v829 = vadd.f32 %v728, %v797
      %v830 = vadd.f32 %v729, %v798
      %v831 = vadd.f32 %v730, %v799
      %v832 = vadd.f32 %v731, %v800
      %v833 = vadd.f32 %v732, %v801
      %v834 = vadd.f32 %v733, %v802
      %v835 = vadd.f32 %v734, %v803
      %v836 = vadd.f32 %v735, %v804
      %v837 = vadd.f32 %v736, %v805
      %v838 = vadd.f32 %v737, %v806
      %v839 = vadd.f32 %v738, %v807
      %v840 = vadd.f32 %v739, %v808
      %v841 = vadd.f32 %v740, %v809
      %v842 = vadd.f32 %v741, %v810
      %v843 = vadd.f32 %v742, %v811
      %v844 = vadd.f32 %v743, %v812
      %v845 = vadd.f32 %v744, %v813
      %v846 = vadd.f32 %v745, %v814
      %v847 = vadd.f32 %v746, %v815
      %v848 = vadd.f32 %v747, %v816
      %v849 = vadd.f32 %v748, %v817
      %v850 = vadd.f32 %v749, %v818
      %v851 = vld [vmem:[%s313 + $0x2] sm:$0xff]
      %v852 = vld [vmem:[%s313 + $0xa] sm:$0xff]
      %v853 = vld [vmem:[%s313 + $0x1a] sm:$0xff]
      %v854 = vld [vmem:[%s313 + $0x22] sm:$0xff]
      %v855 = vld [vmem:[%s313 + $0x32] sm:$0xff]
      %v856 = vld [vmem:[%s313 + $0x3a] sm:$0xff]
      %v857 = vld [vmem:[%s313 + $0x4a] sm:$0xff]
      %v858 = vld [vmem:[%s313 + $0x52] sm:$0xff]
      %v859 = vld [vmem:[%s313 + $0x62] sm:$0xff]
      %v860 = vld [vmem:[%s313 + $0x6a] sm:$0xff]
      %v861 = vld [vmem:[%s313 + $0x7a] sm:$0xff]
      %v862 = vld [vmem:[%s313 + $0x82] sm:$0xff]
      %v863 = vld [vmem:[%s313 + $0x92] sm:$0xff]
      %v864 = vld [vmem:[%s313 + $0x9a] sm:$0xff]
      %v865 = vld [vmem:[%s313 + $0xaa] sm:$0xff]
      %v866 = vld [vmem:[%s313 + $0xb2] sm:$0xff]
      %v867 = vld [vmem:[%s313 + $0xc2] sm:$0xff]
      %v868 = vld [vmem:[%s313 + $0xca] sm:$0xff]
      %v869 = vld [vmem:[%s313 + $0xda] sm:$0xff]
      %v870 = vld [vmem:[%s313 + $0xe2] sm:$0xff]
      %v871 = vld [vmem:[%s313 + $0xf2] sm:$0xff]
      %v872 = vld [vmem:[%s313 + $0xfa] sm:$0xff]
      %v873 = vld [vmem:[%s313 + $0x10a] sm:$0xff]
      %v874 = vld [vmem:[%s313 + $0x112] sm:$0xff]
      %v875 = vld [vmem:[%s313 + $0x122] sm:$0xff]
      %v876 = vld [vmem:[%s313 + $0x12a] sm:$0xff]
      %v877 = vld [vmem:[%s313 + $0x13a] sm:$0xff]
      %v878 = vld [vmem:[%s313 + $0x142] sm:$0xff]
      %v879 = vld [vmem:[%s313 + $0x152] sm:$0xff]
      %v880 = vld [vmem:[%s313 + $0x15a] sm:$0xff]
      %v881 = vld [vmem:[%s313 + $0x16a] sm:$0xff]
      %v882 = vld [vmem:[%s313 + $0x172] sm:$0xff]
      %v883 = vld [vmem:[%s1 + $0x5] sm:$0x1]
      %v884 = vlaneseq
      %v885 = vshrl.u32 %v884, 7
      %v886 = vsub.s32 0, %v885
      %v887 = vrot.slane %v883, %v886
      %v888 = vmul.f32 %v851, %v887
      %v889 = vmul.f32 %v852, %v887
      %v890 = vmul.f32 %v853, %v887
      %v891 = vmul.f32 %v854, %v887
      %v892 = vmul.f32 %v855, %v887
      %v893 = vmul.f32 %v856, %v887
      %v894 = vmul.f32 %v857, %v887
      %v895 = vmul.f32 %v858, %v887
      %v896 = vmul.f32 %v859, %v887
      %v897 = vmul.f32 %v860, %v887
      %v898 = vmul.f32 %v861, %v887
      %v899 = vmul.f32 %v862, %v887
      %v900 = vmul.f32 %v863, %v887
      %v901 = vmul.f32 %v864, %v887
      %v902 = vmul.f32 %v865, %v887
      %v903 = vmul.f32 %v866, %v887
      %v904 = vmul.f32 %v867, %v887
      %v905 = vmul.f32 %v868, %v887
      %v906 = vmul.f32 %v869, %v887
      %v907 = vmul.f32 %v870, %v887
      %v908 = vmul.f32 %v871, %v887
      %v909 = vmul.f32 %v872, %v887
      %v910 = vmul.f32 %v873, %v887
      %v911 = vmul.f32 %v874, %v887
      %v912 = vmul.f32 %v875, %v887
      %v913 = vmul.f32 %v876, %v887
      %v914 = vmul.f32 %v877, %v887
      %v915 = vmul.f32 %v878, %v887
      %v916 = vmul.f32 %v879, %v887
      %v917 = vmul.f32 %v880, %v887
      %v918 = vmul.f32 %v881, %v887
      %v919 = vmul.f32 %v882, %v887
      %v920 = vadd.f32 %v819, %v888
      %v921 = vadd.f32 %v820, %v889
      %v922 = vadd.f32 %v821, %v890
      %v923 = vadd.f32 %v822, %v891
      %v924 = vadd.f32 %v823, %v892
      %v925 = vadd.f32 %v824, %v893
      %v926 = vadd.f32 %v825, %v894
      %v927 = vadd.f32 %v826, %v895
      %v928 = vadd.f32 %v827, %v896
      %v929 = vadd.f32 %v828, %v897
      %v930 = vadd.f32 %v829, %v898
      %v931 = vadd.f32 %v830, %v899
      %v932 = vadd.f32 %v831, %v900
      %v933 = vadd.f32 %v832, %v901
      %v934 = vadd.f32 %v833, %v902
      %v935 = vadd.f32 %v834, %v903
      %v936 = vadd.f32 %v835, %v904
      %v937 = vadd.f32 %v836, %v905
      %v938 = vadd.f32 %v837, %v906
      %v939 = vadd.f32 %v838, %v907
      %v940 = vadd.f32 %v839, %v908
      %v941 = vadd.f32 %v840, %v909
      %v942 = vadd.f32 %v841, %v910
      %v943 = vadd.f32 %v842, %v911
      %v944 = vadd.f32 %v843, %v912
      %v945 = vadd.f32 %v844, %v913
      %v946 = vadd.f32 %v845, %v914
      %v947 = vadd.f32 %v846, %v915
      %v948 = vadd.f32 %v847, %v916
      %v949 = vadd.f32 %v848, %v917
      %v950 = vadd.f32 %v849, %v918
      %v951 = vadd.f32 %v850, %v919
      %s952 = scalar_lea.vmem [#allocation2], 48
      %v953 = vld [vmem:[%s952] sm:$0xff]
      %v954 = vld [vmem:[%s952 + $0x8] sm:$0xff]
      %v955 = vld [vmem:[%s952 + $0x18] sm:$0xff]
      %v956 = vld [vmem:[%s952 + $0x20] sm:$0xff]
      %v957 = vld [vmem:[%s952 + $0x30] sm:$0xff]
      %v958 = vld [vmem:[%s952 + $0x38] sm:$0xff]
      %v959 = vld [vmem:[%s952 + $0x48] sm:$0xff]
      %v960 = vld [vmem:[%s952 + $0x50] sm:$0xff]
      %v961 = vld [vmem:[%s952 + $0x60] sm:$0xff]
      %v962 = vld [vmem:[%s952 + $0x68] sm:$0xff]
      %v963 = vld [vmem:[%s952 + $0x78] sm:$0xff]
      %v964 = vld [vmem:[%s952 + $0x80] sm:$0xff]
      %v965 = vld [vmem:[%s952 + $0x90] sm:$0xff]
      %v966 = vld [vmem:[%s952 + $0x98] sm:$0xff]
      %v967 = vld [vmem:[%s952 + $0xa8] sm:$0xff]
      %v968 = vld [vmem:[%s952 + $0xb0] sm:$0xff]
      %v969 = vld [vmem:[%s952 + $0xc0] sm:$0xff]
      %v970 = vld [vmem:[%s952 + $0xc8] sm:$0xff]
      %v971 = vld [vmem:[%s952 + $0xd8] sm:$0xff]
      %v972 = vld [vmem:[%s952 + $0xe0] sm:$0xff]
      %v973 = vld [vmem:[%s952 + $0xf0] sm:$0xff]
      %v974 = vld [vmem:[%s952 + $0xf8] sm:$0xff]
      %v975 = vld [vmem:[%s952 + $0x108] sm:$0xff]
      %v976 = vld [vmem:[%s952 + $0x110] sm:$0xff]
      %v977 = vld [vmem:[%s952 + $0x120] sm:$0xff]
      %v978 = vld [vmem:[%s952 + $0x128] sm:$0xff]
      %v979 = vld [vmem:[%s952 + $0x138] sm:$0xff]
      %v980 = vld [vmem:[%s952 + $0x140] sm:$0xff]
      %v981 = vld [vmem:[%s952 + $0x150] sm:$0xff]
      %v982 = vld [vmem:[%s952 + $0x158] sm:$0xff]
      %v983 = vld [vmem:[%s952 + $0x168] sm:$0xff]
      %v984 = vld [vmem:[%s952 + $0x170] sm:$0xff]
      %v985 = vld [vmem:[%s1 + $0x6] sm:$0x1]
      %v986 = vlaneseq
      %v987 = vshrl.u32 %v986, 7
      %v988 = vsub.s32 0, %v987
      %v989 = vrot.slane %v985, %v988
      %v990 = vmul.f32 %v953, %v989
      %v991 = vmul.f32 %v954, %v989
      %v992 = vmul.f32 %v955, %v989
      %v993 = vmul.f32 %v956, %v989
      %v994 = vmul.f32 %v957, %v989
      %v995 = vmul.f32 %v958, %v989
      %v996 = vmul.f32 %v959, %v989
      %v997 = vmul.f32 %v960, %v989
      %v998 = vmul.f32 %v961, %v989
      %v999 = vmul.f32 %v962, %v989
      %v1000 = vmul.f32 %v963, %v989
      %v1001 = vmul.f32 %v964, %v989
      %v1002 = vmul.f32 %v965, %v989
      %v1003 = vmul.f32 %v966, %v989
      %v1004 = vmul.f32 %v967, %v989
      %v1005 = vmul.f32 %v968, %v989
      %v1006 = vmul.f32 %v969, %v989
      %v1007 = vmul.f32 %v970, %v989
      %v1008 = vmul.f32 %v971, %v989
      %v1009 = vmul.f32 %v972, %v989
      %v1010 = vmul.f32 %v973, %v989
      %v1011 = vmul.f32 %v974, %v989
      %v1012 = vmul.f32 %v975, %v989
      %v1013 = vmul.f32 %v976, %v989
      %v1014 = vmul.f32 %v977, %v989
      %v1015 = vmul.f32 %v978, %v989
      %v1016 = vmul.f32 %v979, %v989
      %v1017 = vmul.f32 %v980, %v989
      %v1018 = vmul.f32 %v981, %v989
      %v1019 = vmul.f32 %v982, %v989
      %v1020 = vmul.f32 %v983, %v989
      %v1021 = vmul.f32 %v984, %v989
      %v1022 = vadd.f32 %v920, %v990
      %v1023 = vadd.f32 %v921, %v991
      %v1024 = vadd.f32 %v922, %v992
      %v1025 = vadd.f32 %v923, %v993
      %v1026 = vadd.f32 %v924, %v994
      %v1027 = vadd.f32 %v925, %v995
      %v1028 = vadd.f32 %v926, %v996
      %v1029 = vadd.f32 %v927, %v997
      %v1030 = vadd.f32 %v928, %v998
      %v1031 = vadd.f32 %v929, %v999
      %v1032 = vadd.f32 %v930, %v1000
      %v1033 = vadd.f32 %v931, %v1001
      %v1034 = vadd.f32 %v932, %v1002
      %v1035 = vadd.f32 %v933, %v1003
      %v1036 = vadd.f32 %v934, %v1004
      %v1037 = vadd.f32 %v935, %v1005
      %v1038 = vadd.f32 %v936, %v1006
      %v1039 = vadd.f32 %v937, %v1007
      %v1040 = vadd.f32 %v938, %v1008
      %v1041 = vadd.f32 %v939, %v1009
      %v1042 = vadd.f32 %v940, %v1010
      %v1043 = vadd.f32 %v941, %v1011
      %v1044 = vadd.f32 %v942, %v1012
      %v1045 = vadd.f32 %v943, %v1013
      %v1046 = vadd.f32 %v944, %v1014
      %v1047 = vadd.f32 %v945, %v1015
      %v1048 = vadd.f32 %v946, %v1016
      %v1049 = vadd.f32 %v947, %v1017
      %v1050 = vadd.f32 %v948, %v1018
      %v1051 = vadd.f32 %v949, %v1019
      %v1052 = vadd.f32 %v950, %v1020
      %v1053 = vadd.f32 %v951, %v1021
      %v1054 = vld [vmem:[%s952 + $0x1] sm:$0xff]
      %v1055 = vld [vmem:[%s952 + $0x9] sm:$0xff]
      %v1056 = vld [vmem:[%s952 + $0x19] sm:$0xff]
      %v1057 = vld [vmem:[%s952 + $0x21] sm:$0xff]
      %v1058 = vld [vmem:[%s952 + $0x31] sm:$0xff]
      %v1059 = vld [vmem:[%s952 + $0x39] sm:$0xff]
      %v1060 = vld [vmem:[%s952 + $0x49] sm:$0xff]
      %v1061 = vld [vmem:[%s952 + $0x51] sm:$0xff]
      %v1062 = vld [vmem:[%s952 + $0x61] sm:$0xff]
      %v1063 = vld [vmem:[%s952 + $0x69] sm:$0xff]
      %v1064 = vld [vmem:[%s952 + $0x79] sm:$0xff]
      %v1065 = vld [vmem:[%s952 + $0x81] sm:$0xff]
      %v1066 = vld [vmem:[%s952 + $0x91] sm:$0xff]
      %v1067 = vld [vmem:[%s952 + $0x99] sm:$0xff]
      %v1068 = vld [vmem:[%s952 + $0xa9] sm:$0xff]
      %v1069 = vld [vmem:[%s952 + $0xb1] sm:$0xff]
      %v1070 = vld [vmem:[%s952 + $0xc1] sm:$0xff]
      %v1071 = vld [vmem:[%s952 + $0xc9] sm:$0xff]
      %v1072 = vld [vmem:[%s952 + $0xd9] sm:$0xff]
      %v1073 = vld [vmem:[%s952 + $0xe1] sm:$0xff]
      %v1074 = vld [vmem:[%s952 + $0xf1] sm:$0xff]
      %v1075 = vld [vmem:[%s952 + $0xf9] sm:$0xff]
      %v1076 = vld [vmem:[%s952 + $0x109] sm:$0xff]
      %v1077 = vld [vmem:[%s952 + $0x111] sm:$0xff]
      %v1078 = vld [vmem:[%s952 + $0x121] sm:$0xff]
      %v1079 = vld [vmem:[%s952 + $0x129] sm:$0xff]
      %v1080 = vld [vmem:[%s952 + $0x139] sm:$0xff]
      %v1081 = vld [vmem:[%s952 + $0x141] sm:$0xff]
      %v1082 = vld [vmem:[%s952 + $0x151] sm:$0xff]
      %v1083 = vld [vmem:[%s952 + $0x159] sm:$0xff]
      %v1084 = vld [vmem:[%s952 + $0x169] sm:$0xff]
      %v1085 = vld [vmem:[%s952 + $0x171] sm:$0xff]
      %v1086 = vld [vmem:[%s1 + $0x7] sm:$0x1]
      %v1087 = vlaneseq
      %v1088 = vshrl.u32 %v1087, 7
      %v1089 = vsub.s32 0, %v1088
      %v1090 = vrot.slane %v1086, %v1089
      %v1091 = vmul.f32 %v1054, %v1090
      %v1092 = vmul.f32 %v1055, %v1090
      %v1093 = vmul.f32 %v1056, %v1090
      %v1094 = vmul.f32 %v1057, %v1090
      %v1095 = vmul.f32 %v1058, %v1090
      %v1096 = vmul.f32 %v1059, %v1090
      %v1097 = vmul.f32 %v1060, %v1090
      %v1098 = vmul.f32 %v1061, %v1090
      %v1099 = vmul.f32 %v1062, %v1090
      %v1100 = vmul.f32 %v1063, %v1090
      %v1101 = vmul.f32 %v1064, %v1090
      %v1102 = vmul.f32 %v1065, %v1090
      %v1103 = vmul.f32 %v1066, %v1090
      %v1104 = vmul.f32 %v1067, %v1090
      %v1105 = vmul.f32 %v1068, %v1090
      %v1106 = vmul.f32 %v1069, %v1090
      %v1107 = vmul.f32 %v1070, %v1090
      %v1108 = vmul.f32 %v1071, %v1090
      %v1109 = vmul.f32 %v1072, %v1090
      %v1110 = vmul.f32 %v1073, %v1090
      %v1111 = vmul.f32 %v1074, %v1090
      %v1112 = vmul.f32 %v1075, %v1090
      %v1113 = vmul.f32 %v1076, %v1090
      %v1114 = vmul.f32 %v1077, %v1090
      %v1115 = vmul.f32 %v1078, %v1090
      %v1116 = vmul.f32 %v1079, %v1090
      %v1117 = vmul.f32 %v1080, %v1090
      %v1118 = vmul.f32 %v1081, %v1090
      %v1119 = vmul.f32 %v1082, %v1090
      %v1120 = vmul.f32 %v1083, %v1090
      %v1121 = vmul.f32 %v1084, %v1090
      %v1122 = vmul.f32 %v1085, %v1090
      %v1123 = vadd.f32 %v1022, %v1091
      %v1124 = vadd.f32 %v1023, %v1092
      %v1125 = vadd.f32 %v1024, %v1093
      %v1126 = vadd.f32 %v1025, %v1094
      %v1127 = vadd.f32 %v1026, %v1095
      %v1128 = vadd.f32 %v1027, %v1096
      %v1129 = vadd.f32 %v1028, %v1097
      %v1130 = vadd.f32 %v1029, %v1098
      %v1131 = vadd.f32 %v1030, %v1099
      %v1132 = vadd.f32 %v1031, %v1100
      %v1133 = vadd.f32 %v1032, %v1101
      %v1134 = vadd.f32 %v1033, %v1102
      %v1135 = vadd.f32 %v1034, %v1103
      %v1136 = vadd.f32 %v1035, %v1104
      %v1137 = vadd.f32 %v1036, %v1105
      %v1138 = vadd.f32 %v1037, %v1106
      %v1139 = vadd.f32 %v1038, %v1107
      %v1140 = vadd.f32 %v1039, %v1108
      %v1141 = vadd.f32 %v1040, %v1109
      %v1142 = vadd.f32 %v1041, %v1110
      %v1143 = vadd.f32 %v1042, %v1111
      %v1144 = vadd.f32 %v1043, %v1112
      %v1145 = vadd.f32 %v1044, %v1113
      %v1146 = vadd.f32 %v1045, %v1114
      %v1147 = vadd.f32 %v1046, %v1115
      %v1148 = vadd.f32 %v1047, %v1116
      %v1149 = vadd.f32 %v1048, %v1117
      %v1150 = vadd.f32 %v1049, %v1118
      %v1151 = vadd.f32 %v1050, %v1119
      %v1152 = vadd.f32 %v1051, %v1120
      %v1153 = vadd.f32 %v1052, %v1121
      %v1154 = vadd.f32 %v1053, %v1122
      %v1155 = vld [vmem:[%s952 + $0x2] sm:$0xff]
      %v1156 = vld [vmem:[%s952 + $0xa] sm:$0xff]
      %v1157 = vld [vmem:[%s952 + $0x1a] sm:$0xff]
      %v1158 = vld [vmem:[%s952 + $0x22] sm:$0xff]
      %v1159 = vld [vmem:[%s952 + $0x32] sm:$0xff]
      %v1160 = vld [vmem:[%s952 + $0x3a] sm:$0xff]
      %v1161 = vld [vmem:[%s952 + $0x4a] sm:$0xff]
      %v1162 = vld [vmem:[%s952 + $0x52] sm:$0xff]
      %v1163 = vld [vmem:[%s952 + $0x62] sm:$0xff]
      %v1164 = vld [vmem:[%s952 + $0x6a] sm:$0xff]
      %v1165 = vld [vmem:[%s952 + $0x7a] sm:$0xff]
      %v1166 = vld [vmem:[%s952 + $0x82] sm:$0xff]
      %v1167 = vld [vmem:[%s952 + $0x92] sm:$0xff]
      %v1168 = vld [vmem:[%s952 + $0x9a] sm:$0xff]
      %v1169 = vld [vmem:[%s952 + $0xaa] sm:$0xff]
      %v1170 = vld [vmem:[%s952 + $0xb2] sm:$0xff]
      %v1171 = vld [vmem:[%s952 + $0xc2] sm:$0xff]
      %v1172 = vld [vmem:[%s952 + $0xca] sm:$0xff]
      %v1173 = vld [vmem:[%s952 + $0xda] sm:$0xff]
      %v1174 = vld [vmem:[%s952 + $0xe2] sm:$0xff]
      %v1175 = vld [vmem:[%s952 + $0xf2] sm:$0xff]
      %v1176 = vld [vmem:[%s952 + $0xfa] sm:$0xff]
      %v1177 = vld [vmem:[%s952 + $0x10a] sm:$0xff]
      %v1178 = vld [vmem:[%s952 + $0x112] sm:$0xff]
      %v1179 = vld [vmem:[%s952 + $0x122] sm:$0xff]
      %v1180 = vld [vmem:[%s952 + $0x12a] sm:$0xff]
      %v1181 = vld [vmem:[%s952 + $0x13a] sm:$0xff]
      %v1182 = vld [vmem:[%s952 + $0x142] sm:$0xff]
      %v1183 = vld [vmem:[%s952 + $0x152] sm:$0xff]
      %v1184 = vld [vmem:[%s952 + $0x15a] sm:$0xff]
      %v1185 = vld [vmem:[%s952 + $0x16a] sm:$0xff]
      %v1186 = vld [vmem:[%s952 + $0x172] sm:$0xff]
      %v1187 = vld [vmem:[%s1 + $0x8] sm:$0x1]
      %v1188 = vlaneseq
      %v1189 = vshrl.u32 %v1188, 7
      %v1190 = vsub.s32 0, %v1189
      %v1191 = vrot.slane %v1187, %v1190
      %v1192 = vmul.f32 %v1155, %v1191
      %v1193 = vmul.f32 %v1156, %v1191
      %v1194 = vmul.f32 %v1157, %v1191
      %v1195 = vmul.f32 %v1158, %v1191
      %v1196 = vmul.f32 %v1159, %v1191
      %v1197 = vmul.f32 %v1160, %v1191
      %v1198 = vmul.f32 %v1161, %v1191
      %v1199 = vmul.f32 %v1162, %v1191
      %v1200 = vmul.f32 %v1163, %v1191
      %v1201 = vmul.f32 %v1164, %v1191
      %v1202 = vmul.f32 %v1165, %v1191
      %v1203 = vmul.f32 %v1166, %v1191
      %v1204 = vmul.f32 %v1167, %v1191
      %v1205 = vmul.f32 %v1168, %v1191
      %v1206 = vmul.f32 %v1169, %v1191
      %v1207 = vmul.f32 %v1170, %v1191
      %v1208 = vmul.f32 %v1171, %v1191
      %v1209 = vmul.f32 %v1172, %v1191
      %v1210 = vmul.f32 %v1173, %v1191
      %v1211 = vmul.f32 %v1174, %v1191
      %v1212 = vmul.f32 %v1175, %v1191
      %v1213 = vmul.f32 %v1176, %v1191
      %v1214 = vmul.f32 %v1177, %v1191
      %v1215 = vmul.f32 %v1178, %v1191
      %v1216 = vmul.f32 %v1179, %v1191
      %v1217 = vmul.f32 %v1180, %v1191
      %v1218 = vmul.f32 %v1181, %v1191
      %v1219 = vmul.f32 %v1182, %v1191
      %v1220 = vmul.f32 %v1183, %v1191
      %v1221 = vmul.f32 %v1184, %v1191
      %v1222 = vmul.f32 %v1185, %v1191
      %v1223 = vmul.f32 %v1186, %v1191
      %v1224 = vadd.f32 %v1123, %v1192
      %v1225 = vadd.f32 %v1124, %v1193
      %v1226 = vadd.f32 %v1125, %v1194
      %v1227 = vadd.f32 %v1126, %v1195
      %v1228 = vadd.f32 %v1127, %v1196
      %v1229 = vadd.f32 %v1128, %v1197
      %v1230 = vadd.f32 %v1129, %v1198
      %v1231 = vadd.f32 %v1130, %v1199
      %v1232 = vadd.f32 %v1131, %v1200
      %v1233 = vadd.f32 %v1132, %v1201
      %v1234 = vadd.f32 %v1133, %v1202
      %v1235 = vadd.f32 %v1134, %v1203
      %v1236 = vadd.f32 %v1135, %v1204
      %v1237 = vadd.f32 %v1136, %v1205
      %v1238 = vadd.f32 %v1137, %v1206
      %v1239 = vadd.f32 %v1138, %v1207
      %v1240 = vadd.f32 %v1139, %v1208
      %v1241 = vadd.f32 %v1140, %v1209
      %v1242 = vadd.f32 %v1141, %v1210
      %v1243 = vadd.f32 %v1142, %v1211
      %v1244 = vadd.f32 %v1143, %v1212
      %v1245 = vadd.f32 %v1144, %v1213
      %v1246 = vadd.f32 %v1145, %v1214
      %v1247 = vadd.f32 %v1146, %v1215
      %v1248 = vadd.f32 %v1147, %v1216
      %v1249 = vadd.f32 %v1148, %v1217
      %v1250 = vadd.f32 %v1149, %v1218
      %v1251 = vadd.f32 %v1150, %v1219
      %v1252 = vadd.f32 %v1151, %v1220
      %v1253 = vadd.f32 %v1152, %v1221
      %v1254 = vadd.f32 %v1153, %v1222
      %v1255 = vadd.f32 %v1154, %v1223
      %v1256 = vld [vmem:[%s2] sm:$0x1]
      %v1258 = vlaneseq
      %v1259 = vshrl.u32 %v1258, 7
      %v1260 = vsub.s32 0, %v1259
      %v1261 = vrot.slane %v1256, %v1260
      %v1263 = vadd.f32 %v1224, %v1261
      %v1264 = vadd.f32 %v1225, %v1261
      %v1265 = vadd.f32 %v1226, %v1261
      %v1266 = vadd.f32 %v1227, %v1261
      %v1267 = vadd.f32 %v1228, %v1261
      %v1268 = vadd.f32 %v1229, %v1261
      %v1269 = vadd.f32 %v1230, %v1261
      %v1270 = vadd.f32 %v1231, %v1261
      %v1271 = vadd.f32 %v1232, %v1261
      %v1272 = vadd.f32 %v1233, %v1261
      %v1273 = vadd.f32 %v1234, %v1261
      %v1274 = vadd.f32 %v1235, %v1261
      %v1275 = vadd.f32 %v1236, %v1261
      %v1276 = vadd.f32 %v1237, %v1261
      %v1277 = vadd.f32 %v1238, %v1261
      %v1278 = vadd.f32 %v1239, %v1261
      %v1279 = vadd.f32 %v1240, %v1261
      %v1280 = vadd.f32 %v1241, %v1261
      %v1281 = vadd.f32 %v1242, %v1261
      %v1282 = vadd.f32 %v1243, %v1261
      %v1283 = vadd.f32 %v1244, %v1261
      %v1284 = vadd.f32 %v1245, %v1261
      %v1285 = vadd.f32 %v1246, %v1261
      %v1286 = vadd.f32 %v1247, %v1261
      %v1287 = vadd.f32 %v1248, %v1261
      %v1288 = vadd.f32 %v1249, %v1261
      %v1289 = vadd.f32 %v1250, %v1261
      %v1290 = vadd.f32 %v1251, %v1261
      %v1291 = vadd.f32 %v1252, %v1261
      %v1292 = vadd.f32 %v1253, %v1261
      %v1293 = vadd.f32 %v1254, %v1261
      %v1294 = vadd.f32 %v1255, %v1261
      %v1295 = vld [vmem:[%s3] sm:$0xf]
      %v1296 = vld [vmem:[%s4] sm:$0x1]
      %v1298 = vlaneseq
      %v1299 = vshrl.u32 %v1298, 7
      %v1300 = vsub.s32 0, %v1299
      %v1301 = vrot.slane %v1296, %v1300
      %v1304 = vsel %vm257, %v1263, 0
      %v1307 = vsel %vm257, %v1264, 0
      %v1310 = vsel %vm257, %v1265, 0
      %v1313 = vsel %vm257, %v1266, 0
      %v1316 = vsel %vm257, %v1267, 0
      %v1319 = vsel %vm257, %v1268, 0
      %v1322 = vsel %vm257, %v1269, 0
      %v1325 = vsel %vm257, %v1270, 0
      %v1328 = vsel %vm257, %v1271, 0
      %v1331 = vsel %vm257, %v1272, 0
      %v1334 = vsel %vm257, %v1273, 0
      %v1337 = vsel %vm257, %v1274, 0
      %v1340 = vsel %vm257, %v1275, 0
      %v1343 = vsel %vm257, %v1276, 0
      %v1346 = vsel %vm257, %v1277, 0
      %v1349 = vsel %vm257, %v1278, 0
      %v1352 = vsel %vm257, %v1279, 0
      %v1355 = vsel %vm257, %v1280, 0
      %v1358 = vsel %vm257, %v1281, 0
      %v1361 = vsel %vm257, %v1282, 0
      %v1364 = vsel %vm257, %v1283, 0
      %v1367 = vsel %vm257, %v1284, 0
      %v1370 = vsel %vm257, %v1285, 0
      %v1373 = vsel %vm257, %v1286, 0
      %v1376 = vsel %vm257, %v1287, 0
      %v1379 = vsel %vm257, %v1288, 0
      %v1382 = vsel %vm257, %v1289, 0
      %v1385 = vsel %vm257, %v1290, 0
      %v1388 = vsel %vm257, %v1291, 0
      %v1391 = vsel %vm257, %v1292, 0
      %v1394 = vsel %vm257, %v1293, 0
      %v1397 = vsel %vm257, %v1294, 0
      %vm1399 = vcmask 1043456
      %v1401 = vsel %vm1399, %v1295, 0
      %1403 = vmatprep.subr.mxu0 0.0
      %1404 = vmatpush1.msra.mxu0 0.0
      %1405 = vmatprep.subr.mxu0 0.0
      %1406 = vmatpush1.msra.mxu0 0.0
      %1407 = vmatprep.subr.mxu0 0.0
      %1408 = vmatpush1.msra.mxu0 0.0
      %1409 = vmatprep.subr.mxu0 0.0
      %1410 = vmatpush1.msra.mxu0 0.0
      %1411 = vmatprep.subr.mxu0 0.0
      %1412 = vmatpush1.msra.mxu0 0.0
      %1413 = vmatprep.subr.mxu0 0.0
      %1414 = vmatpush1.msra.mxu0 0.0
      %1415 = vmatprep.subr.mxu0 0.0
      %1416 = vmatpush1.msra.mxu0 0.0
      %1417 = vmatprep.subr.mxu0 0.0
      %1418 = vmatpush1.msra.mxu0 0.0
      %1419 = vmatprep.subr.mxu0 0.0
      %1420 = vmatpush1.msra.mxu0 0.0
      %1421 = vmatprep.subr.mxu0 0.0
      %1422 = vmatpush1.msra.mxu0 0.0
      %1423 = vmatprep.subr.mxu0 0.0
      %1424 = vmatpush1.msra.mxu0 0.0
      %1425 = vmatprep.subr.mxu0 0.0
      %1426 = vmatpush1.msra.mxu0 0.0
      %1427 = vmatprep.subr.mxu0 0.0
      %1428 = vmatpush1.msra.mxu0 0.0
      %1429 = vmatprep.subr.mxu0 0.0
      %1430 = vmatpush1.msra.mxu0 0.0
      %1431 = vmatprep.subr.mxu0 0.0
      %1432 = vmatpush1.msra.mxu0 0.0
      %1433 = vmatprep.subr.mxu0 0.0
      %1434 = vmatpush1.msra.mxu0 %v1401
      %1435 = vmatprep.subr.mxu0 0.0
      %1436 = vmatpush2.msra.mxu0 0.0
      %1437 = vmatprep.subr.mxu0 0.0
      %1438 = vmatpush2.msra.mxu0 0.0
      %1439 = vmatprep.subr.mxu0 0.0
      %1440 = vmatpush2.msra.mxu0 0.0
      %1441 = vmatprep.subr.mxu0 0.0
      %1442 = vmatpush2.msra.mxu0 0.0
      %1443 = vmatprep.subr.mxu0 0.0
      %1444 = vmatpush2.msra.mxu0 0.0
      %1445 = vmatprep.subr.mxu0 0.0
      %1446 = vmatpush2.msra.mxu0 0.0
      %1447 = vmatprep.subr.mxu0 0.0
      %1448 = vmatpush2.msra.mxu0 0.0
      %1449 = vmatprep.subr.mxu0 0.0
      %1450 = vmatpush2.msra.mxu0 0.0
      %1451 = vmatprep.subr.mxu0 0.0
      %1452 = vmatpush2.msra.mxu0 0.0
      %1453 = vmatprep.subr.mxu0 0.0
      %1454 = vmatpush2.msra.mxu0 0.0
      %1455 = vmatprep.subr.mxu0 0.0
      %1456 = vmatpush2.msra.mxu0 0.0
      %1457 = vmatprep.subr.mxu0 0.0
      %1458 = vmatpush2.msra.mxu0 0.0
      %1459 = vmatprep.subr.mxu0 0.0
      %1460 = vmatpush2.msra.mxu0 0.0
      %1461 = vmatprep.subr.mxu0 0.0
      %1462 = vmatpush2.msra.mxu0 0.0
      %1463 = vmatprep.subr.mxu0 0.0
      %1464 = vmatpush2.msra.mxu0 0.0
      %1465 = vmatprep.subr.mxu0 0.0
      %1466 = vmatpush2.msra.mxu0 0.0
      %1467 = vmatprep.mubr.f32.mxu0 0.0
      %1468 = vmatmul.mubr.f32.gmra.mxu0 %v1304
      %v1469 = vpop.f32.mrf.mxu0
      %v1470 = vadd.f32 %v1301, %v1469
      %v1471 = vpop.f32.mrf.mxu0
      %1472 = vmatprep.mubr.f32.mxu0 0.0
      %1473 = vmatmul.mubr.f32.gmra.mxu0 %v1307
      %v1474 = vpop.f32.mrf.mxu0
      %v1475 = vadd.f32 %v1301, %v1474
      %v1476 = vpop.f32.mrf.mxu0
      %1477 = vmatprep.mubr.f32.mxu0 0.0
      %1478 = vmatmul.mubr.f32.gmra.mxu0 %v1310
      %v1479 = vpop.f32.mrf.mxu0
      %v1480 = vadd.f32 %v1301, %v1479
      %v1481 = vpop.f32.mrf.mxu0
      %1482 = vmatprep.mubr.f32.mxu0 0.0
      %1483 = vmatmul.mubr.f32.gmra.mxu0 %v1313
      %v1484 = vpop.f32.mrf.mxu0
      %v1485 = vadd.f32 %v1301, %v1484
      %v1486 = vpop.f32.mrf.mxu0
      %1487 = vmatprep.mubr.f32.mxu0 0.0
      %1488 = vmatmul.mubr.f32.gmra.mxu0 %v1316
      %v1489 = vpop.f32.mrf.mxu0
      %v1490 = vadd.f32 %v1301, %v1489
      %v1491 = vpop.f32.mrf.mxu0
      %1492 = vmatprep.mubr.f32.mxu0 0.0
      %1493 = vmatmul.mubr.f32.gmra.mxu0 %v1319
      %v1494 = vpop.f32.mrf.mxu0
      %v1495 = vadd.f32 %v1301, %v1494
      %v1496 = vpop.f32.mrf.mxu0
      %1497 = vmatprep.mubr.f32.mxu0 0.0
      %1498 = vmatmul.mubr.f32.gmra.mxu0 %v1322
      %v1499 = vpop.f32.mrf.mxu0
      %v1500 = vadd.f32 %v1301, %v1499
      %v1501 = vpop.f32.mrf.mxu0
      %1502 = vmatprep.mubr.f32.mxu0 0.0
      %1503 = vmatmul.mubr.f32.gmra.mxu0 %v1325
      %v1504 = vpop.f32.mrf.mxu0
      %v1505 = vadd.f32 %v1301, %v1504
      %v1506 = vpop.f32.mrf.mxu0
      %1507 = vmatprep.mubr.f32.mxu0 0.0
      %1508 = vmatmul.mubr.f32.gmra.mxu0 %v1328
      %v1509 = vpop.f32.mrf.mxu0
      %v1510 = vadd.f32 %v1301, %v1509
      %v1511 = vpop.f32.mrf.mxu0
      %1512 = vmatprep.mubr.f32.mxu0 0.0
      %1513 = vmatmul.mubr.f32.gmra.mxu0 %v1331
      %v1514 = vpop.f32.mrf.mxu0
      %v1515 = vadd.f32 %v1301, %v1514
      %v1516 = vpop.f32.mrf.mxu0
      %1517 = vmatprep.mubr.f32.mxu0 0.0
      %1518 = vmatmul.mubr.f32.gmra.mxu0 %v1334
      %v1519 = vpop.f32.mrf.mxu0
      %v1520 = vadd.f32 %v1301, %v1519
      %v1521 = vpop.f32.mrf.mxu0
      %1522 = vmatprep.mubr.f32.mxu0 0.0
      %1523 = vmatmul.mubr.f32.gmra.mxu0 %v1337
      %v1524 = vpop.f32.mrf.mxu0
      %v1525 = vadd.f32 %v1301, %v1524
      %v1526 = vpop.f32.mrf.mxu0
      %1527 = vmatprep.mubr.f32.mxu0 0.0
      %1528 = vmatmul.mubr.f32.gmra.mxu0 %v1340
      %v1529 = vpop.f32.mrf.mxu0
      %v1530 = vadd.f32 %v1301, %v1529
      %v1531 = vpop.f32.mrf.mxu0
      %1532 = vmatprep.mubr.f32.mxu0 0.0
      %1533 = vmatmul.mubr.f32.gmra.mxu0 %v1343
      %v1534 = vpop.f32.mrf.mxu0
      %v1535 = vadd.f32 %v1301, %v1534
      %v1536 = vpop.f32.mrf.mxu0
      %1537 = vmatprep.mubr.f32.mxu0 0.0
      %1538 = vmatmul.mubr.f32.gmra.mxu0 %v1346
      %v1539 = vpop.f32.mrf.mxu0
      %v1540 = vadd.f32 %v1301, %v1539
      %v1541 = vpop.f32.mrf.mxu0
      %1542 = vmatprep.mubr.f32.mxu0 0.0
      %1543 = vmatmul.mubr.f32.gmra.mxu0 %v1349
      %v1544 = vpop.f32.mrf.mxu0
      %v1545 = vadd.f32 %v1301, %v1544
      %v1546 = vpop.f32.mrf.mxu0
      %1547 = vmatprep.mubr.f32.mxu0 0.0
      %1548 = vmatmul.mubr.f32.gmra.mxu0 %v1352
      %v1549 = vpop.f32.mrf.mxu0
      %v1550 = vadd.f32 %v1301, %v1549
      %v1551 = vpop.f32.mrf.mxu0
      %1552 = vmatprep.mubr.f32.mxu0 0.0
      %1553 = vmatmul.mubr.f32.gmra.mxu0 %v1355
      %v1554 = vpop.f32.mrf.mxu0
      %v1555 = vadd.f32 %v1301, %v1554
      %v1556 = vpop.f32.mrf.mxu0
      %1557 = vmatprep.mubr.f32.mxu0 0.0
      %1558 = vmatmul.mubr.f32.gmra.mxu0 %v1358
      %v1559 = vpop.f32.mrf.mxu0
      %v1560 = vadd.f32 %v1301, %v1559
      %v1561 = vpop.f32.mrf.mxu0
      %1562 = vmatprep.mubr.f32.mxu0 0.0
      %1563 = vmatmul.mubr.f32.gmra.mxu0 %v1361
      %v1564 = vpop.f32.mrf.mxu0
      %v1565 = vadd.f32 %v1301, %v1564
      %v1566 = vpop.f32.mrf.mxu0
      %1567 = vmatprep.mubr.f32.mxu0 0.0
      %1568 = vmatmul.mubr.f32.gmra.mxu0 %v1364
      %v1569 = vpop.f32.mrf.mxu0
      %v1570 = vadd.f32 %v1301, %v1569
      %v1571 = vpop.f32.mrf.mxu0
      %1572 = vmatprep.mubr.f32.mxu0 0.0
      %1573 = vmatmul.mubr.f32.gmra.mxu0 %v1367
      %v1574 = vpop.f32.mrf.mxu0
      %v1575 = vadd.f32 %v1301, %v1574
      %v1576 = vpop.f32.mrf.mxu0
      %1577 = vmatprep.mubr.f32.mxu0 0.0
      %1578 = vmatmul.mubr.f32.gmra.mxu0 %v1370
      %v1579 = vpop.f32.mrf.mxu0
      %v1580 = vadd.f32 %v1301, %v1579
      %v1581 = vpop.f32.mrf.mxu0
      %1582 = vmatprep.mubr.f32.mxu0 0.0
      %1583 = vmatmul.mubr.f32.gmra.mxu0 %v1373
      %v1584 = vpop.f32.mrf.mxu0
      %v1585 = vadd.f32 %v1301, %v1584
      %v1586 = vpop.f32.mrf.mxu0
      %1587 = vmatprep.mubr.f32.mxu0 0.0
      %1588 = vmatmul.mubr.f32.gmra.mxu0 %v1376
      %v1589 = vpop.f32.mrf.mxu0
      %v1590 = vadd.f32 %v1301, %v1589
      %v1591 = vpop.f32.mrf.mxu0
      %1592 = vmatprep.mubr.f32.mxu0 0.0
      %1593 = vmatmul.mubr.f32.gmra.mxu0 %v1379
      %v1594 = vpop.f32.mrf.mxu0
      %v1595 = vadd.f32 %v1301, %v1594
      %v1596 = vpop.f32.mrf.mxu0
      %1597 = vmatprep.mubr.f32.mxu0 0.0
      %1598 = vmatmul.mubr.f32.gmra.mxu0 %v1382
      %v1599 = vpop.f32.mrf.mxu0
      %v1600 = vadd.f32 %v1301, %v1599
      %v1601 = vpop.f32.mrf.mxu0
      %1602 = vmatprep.mubr.f32.mxu0 0.0
      %1603 = vmatmul.mubr.f32.gmra.mxu0 %v1385
      %v1604 = vpop.f32.mrf.mxu0
      %v1605 = vadd.f32 %v1301, %v1604
      %v1606 = vpop.f32.mrf.mxu0
      %1607 = vmatprep.mubr.f32.mxu0 0.0
      %1608 = vmatmul.mubr.f32.gmra.mxu0 %v1388
      %v1609 = vpop.f32.mrf.mxu0
      %v1610 = vadd.f32 %v1301, %v1609
      %v1611 = vpop.f32.mrf.mxu0
      %1612 = vmatprep.mubr.f32.mxu0 0.0
      %1613 = vmatmul.mubr.f32.gmra.mxu0 %v1391
      %v1614 = vpop.f32.mrf.mxu0
      %v1615 = vadd.f32 %v1301, %v1614
      %v1616 = vpop.f32.mrf.mxu0
      %1617 = vmatprep.mubr.f32.mxu0 0.0
      %1618 = vmatmul.mubr.f32.gmra.mxu0 %v1394
      %v1619 = vpop.f32.mrf.mxu0
      %v1620 = vadd.f32 %v1301, %v1619
      %v1621 = vpop.f32.mrf.mxu0
      %1622 = vmatprep.mubr.f32.mxu0 0.0
      %1623 = vmatmul.mubr.f32.gmra.mxu0 %v1397
      %v1624 = vpop.f32.mrf.mxu0
      %v1625 = vadd.f32 %v1301, %v1624
      %v1626 = vpop.f32.mrf.mxu0
      %1627 = vdwg.mxu0
      %vm1628 = vcmask 64512
      %1629 = vst.msk [vmem:[%s224] sm:$0xff] %vm1628, %v1470
      %1630 = vst.msk [vmem:[%s224 + $0x8] sm:$0xff] %vm1628, %v1475
      %1631 = vst.msk [vmem:[%s224 + $0x10] sm:$0xff] %vm1628, %v1480
      %1632 = vst.msk [vmem:[%s224 + $0x18] sm:$0xff] %vm1628, %v1485
      %1633 = vst.msk [vmem:[%s224 + $0x20] sm:$0xff] %vm1628, %v1490
      %1634 = vst.msk [vmem:[%s224 + $0x28] sm:$0xff] %vm1628, %v1495
      %1635 = vst.msk [vmem:[%s224 + $0x30] sm:$0xff] %vm1628, %v1500
      %1636 = vst.msk [vmem:[%s224 + $0x38] sm:$0xff] %vm1628, %v1505
      %1637 = vst.msk [vmem:[%s224 + $0x40] sm:$0xff] %vm1628, %v1510
      %1638 = vst.msk [vmem:[%s224 + $0x48] sm:$0xff] %vm1628, %v1515
      %1639 = vst.msk [vmem:[%s224 + $0x50] sm:$0xff] %vm1628, %v1520
      %1640 = vst.msk [vmem:[%s224 + $0x58] sm:$0xff] %vm1628, %v1525
      %1641 = vst.msk [vmem:[%s224 + $0x60] sm:$0xff] %vm1628, %v1530
      %1642 = vst.msk [vmem:[%s224 + $0x68] sm:$0xff] %vm1628, %v1535
      %1643 = vst.msk [vmem:[%s224 + $0x70] sm:$0xff] %vm1628, %v1540
      %1644 = vst.msk [vmem:[%s224 + $0x78] sm:$0xff] %vm1628, %v1545
      %1645 = vst.msk [vmem:[%s224 + $0x80] sm:$0xff] %vm1628, %v1550
      %1646 = vst.msk [vmem:[%s224 + $0x88] sm:$0xff] %vm1628, %v1555
      %1647 = vst.msk [vmem:[%s224 + $0x90] sm:$0xff] %vm1628, %v1560
      %1648 = vst.msk [vmem:[%s224 + $0x98] sm:$0xff] %vm1628, %v1565
      %1649 = vst.msk [vmem:[%s224 + $0xa0] sm:$0xff] %vm1628, %v1570
      %1650 = vst.msk [vmem:[%s224 + $0xa8] sm:$0xff] %vm1628, %v1575
      %1651 = vst.msk [vmem:[%s224 + $0xb0] sm:$0xff] %vm1628, %v1580
      %1652 = vst.msk [vmem:[%s224 + $0xb8] sm:$0xff] %vm1628, %v1585
      %1653 = vst.msk [vmem:[%s224 + $0xc0] sm:$0xff] %vm1628, %v1590
      %1654 = vst.msk [vmem:[%s224 + $0xc8] sm:$0xff] %vm1628, %v1595
      %1655 = vst.msk [vmem:[%s224 + $0xd0] sm:$0xff] %vm1628, %v1600
      %1656 = vst.msk [vmem:[%s224 + $0xd8] sm:$0xff] %vm1628, %v1605
      %1657 = vst.msk [vmem:[%s224 + $0xe0] sm:$0xff] %vm1628, %v1610
      %1658 = vst.msk [vmem:[%s224 + $0xe8] sm:$0xff] %vm1628, %v1615
      %1659 = vst.msk [vmem:[%s224 + $0xf0] sm:$0xff] %vm1628, %v1620
      %1660 = vst.msk [vmem:[%s224 + $0xf8] sm:$0xff] %vm1628, %v1625
      %p1661 = scmp.lt.s32.totalorder %s16, 1
      %s1662 = scalar_select %p1661, %s16, 1
      %s1663 = smul.addr %s1662, 32
      %s1664 = smul.addr %s1663, 8
      %s1665 = scalar_lea.vmem %s5, %s1664
      // Predicated region
      $region41: #{tpu_custom_call.1} parent=39 // pred_check
        %p1666 = pneg %p144
      $region42: #{tpu_custom_call.1} parent=39 // pred_check_branch
        %1668 = sbr.rel (%p1666) target = $region44
      $region43: #{tpu_custom_call.1} parent=39 // pred_region
        _
      $region44: #{tpu_custom_call.1} parent=39 // pred_fallthru
        _
    $region40: #{tpu_custom_call.1} parent=5 // pred_fallthru
      _
    %p1669 = scmp.le.s32.totalorder 2, %s11
    // Predicated region
    $region45: #{tpu_custom_call.1} parent=5 // pred_check
      %p1670 = pneg %p1669
    $region46: #{tpu_custom_call.1} parent=5 // pred_check_branch
      %1672 = sbr.rel (%p1670) target = $region48
    $region47: #{tpu_custom_call.1} parent=5 // pred_region
      %s1673 = ssub.s32 %s11, 2
      // Predicated region
      $region49: #{tpu_custom_call.1} parent=47 // pred_check
        %p1674 = pneg %p150
      $region50: #{tpu_custom_call.1} parent=47 // pred_check_branch
        %1676 = sbr.rel (%p1674) target = $region52
      $region51: #{tpu_custom_call.1} parent=47 // pred_region
        %p1677 = scmp.lt.s32.totalorder %s17, 1
        %s1678 = scalar_select %p1677, %s17, 1
        %s1679 = smul.addr %s1678, 32
        %s1680 = smul.addr %s1679, 8
        %s1681 = scalar_lea.vmem %s5, %s1680
      $region52: #{tpu_custom_call.1} parent=47 // pred_fallthru
        _
    $region48: #{tpu_custom_call.1} parent=5 // pred_fallthru
      _
  $region6: #{tpu_custom_call.1} parent=0 // loop_footer
    %s15 = sadd.s32 1, %s11
  $region7: #{tpu_custom_call.1} parent=0 // loop_footer_branch
    %10 = sbr.rel target = $region3
  $region8: #{tpu_custom_call.1} parent=0 // loop_exit
    _

</llo_original>
